<compile_context>
chip_gen: v5e
topology: v5e:2x2
jax: 0.10.0
libtpu: 0.0.40
codegen_flags: <defaults>
</compile_context>

<pallas_src>
import functools

import jax
import jax.numpy as jnp
import numpy as np
from jax.experimental import pallas as pl
from jax.experimental.pallas import tpu as pltpu


def _unetup_kernel(xf_ref, wf_ref, o_ref, acc_ref, *, hout, wout):
    """Grid step = (batch element, output-channel block).

    xf_ref : (1, Hh, Wout, Kp)    window+parity-folded, zero-padded input (bf16)
    wf_ref : (2, Kp, Cblk)        weight regrouped by row-block shift dh (bf16)
    o_ref  : (1, Hout*Wout, Cblk) output (bf16)
    acc_ref: (Hout*Wout, Cblk)    f32 accumulator scratch (VMEM)
    """
    kp = wf_ref.shape[1]
    m = hout * wout

    # Conv: out(oh, ow) = sum_{dh in {0,1}} xf[oh+dh, ow, :] @ wf[dh]
    # Two large-K MXU dots; the dh shift is a free base-offset slice on a
    # non-vreg axis.  (Wout a multiple of the sublane tile makes the
    # (hout, wout, K) -> (M, K) flatten layout-free; true for production.)
    x0 = xf_ref[0, 0:hout].reshape(m, kp)
    acc_ref[...] = jnp.dot(x0, wf_ref[0], preferred_element_type=jnp.float32)
    x1 = xf_ref[0, 1:hout + 1].reshape(m, kp)
    acc_ref[...] += jnp.dot(x1, wf_ref[1], preferred_element_type=jnp.float32)

    acc = acc_ref[...]

    # InstanceNorm2d (affine=False, eps=1e-5), fused single stats pass:
    # biased variance via E[x^2] - mean^2 (f32, clamped at 0).  No conv-bias
    # add: a constant per-channel bias is cancelled exactly by the mean
    # subtraction.  Padded output channels have identically-zero weights, so
    # acc == 0 there and y == 0 (the rsqrt(eps) factor multiplies an exact 0).
    inv_m = jnp.float32(1.0 / m)
    mean = jnp.sum(acc, axis=0, keepdims=True) * inv_m
    ex2 = jnp.sum(acc * acc, axis=0, keepdims=True) * inv_m
    var = jnp.maximum(ex2 - mean * mean, 0.0)
    inv_std = jax.lax.rsqrt(var + 1e-5)                       # EUP

    # ReLU fused with the normalize + bf16 cast at the (lane-dense) store.
    o_ref[0] = jnp.maximum((acc - mean) * inv_std, 0.0).astype(o_ref.dtype)


def unet_up_forward(x_nchw, weight_hwio, bias=None, skip_nchw=None, *,
                    nchw_out=True):
    """Pallas implementation of UNetUp.forward (kernel_size=4, stride=2, pad=1).

    `bias` is accepted for API parity with nn.Conv2d but intentionally unused:
    InstanceNorm removes any constant per-channel offset, so the result is
    mathematically identical without it.  Returns bf16, NCHW by default.
    """
    del bias  # cancelled exactly by InstanceNorm's mean subtraction

    if skip_nchw is not None:
        x_nchw = jnp.concatenate(
            [x_nchw.astype(jnp.bfloat16), skip_nchw.astype(jnp.bfloat16)],
            axis=1)
    else:
        x_nchw = x_nchw.astype(jnp.bfloat16)

    n, cin, h, w = x_nchw.shape
    kh, kw, w_cin, cout = weight_hwio.shape
    assert (kh, kw) == (4, 4), "this kernel is specialized for kernel_size=4"
    assert w_cin == cin, "weight in_channels must match concatenated input"
    assert h % 2 == 0 and w % 2 == 0, "even spatial dims required (k=4,s=2,p=1)"

    hout, wout = h // 2, w // 2
    hh, wh = h // 2 + 1, w // 2 + 1          # half sizes of the padded input
    m = hout * wout

    k8 = 8 * cin
    kp = ((k8 + 127) // 128) * 128           # lane-dense contraction dim
    cp = ((cout + 127) // 128) * 128         # lane-dense output channels
    # Output-channel block = second parallel grid axis (256-aligned when the
    # channel count allows, matching the 256-wide v6e/v7x MXU).
    c_blk = 256 if (cp % 256 == 0 and cp >= 256) else 128
    c_blk = min(c_blk, cp)
    n_cblk = cp // c_blk

    # ---- wrapper glue: NCHW -> NHWC, zero-pad, fold the 4-tap column window
    # and the row parity into channels:
    #   xf[n, r, ow, (ph, kw, c)] = x_pad[n, 2*r + ph, 2*ow + kw, c]
    xh = jnp.transpose(x_nchw, (0, 2, 3, 1))                     # NHWC
    xp = jnp.pad(xh, ((0, 0), (1, 1), (1, 1), (0, 0)))           # (N, 2Hh, 2Wh, C)
    xc = xp.reshape(n, 2 * hh, wh, 2 * cin)                      # col parity -> C
    xw = jnp.concatenate(                                        # full 4-tap window
        [xc[:, :, :wout, :], xc[:, :, 1:wout + 1, :]], axis=-1)  # (N, 2Hh, Wout, 4C)
    xf = xw.reshape(n, hh, 2, wout, 4 * cin)                     # split row parity
    xf = xf.transpose(0, 1, 3, 2, 4).reshape(n, hh, wout, k8)    # (N, Hh, Wout, 8C)
    if kp != k8:
        xf = jnp.pad(xf, ((0, 0), (0, 0), (0, 0), (0, kp - k8)))

    # Weight (kh, kw, Cin, Cout) with kh = 2*dh + ph
    #   -> (dh, (ph, kw, c), Cout); zero-pad K -> Kp and Cout -> Cp.
    wf = weight_hwio.astype(jnp.bfloat16).reshape(2, k8, cout)
    wf = jnp.pad(wf, ((0, 0), (0, kp - k8), (0, cp - cout)))

    # ---- VMEM budget: double-buffered input/output blocks, single- or
    # double-buffered weights, the f32 accumulator scratch, margin for norm
    # temps and compiler-internal scratch; cap at 3/4 of physical VMEM.
    in_blk = hh * wout * kp * 2                    # bf16
    w_blk = 2 * kp * c_blk * 2                     # bf16
    out_blk = m * c_blk * 2                        # bf16
    acc_blk = m * c_blk * 4                        # f32 scratch
    single_buffer_w = (n_cblk == 1) and hasattr(pl, "Buffered")
    est = (2 * in_blk + (1 if single_buffer_w else 2) * w_blk
           + 2 * out_blk + 2 * acc_blk + (2 << 20))
    try:
        phys_vmem = pltpu.get_tpu_info().vmem_capacity_bytes
    except Exception:
        phys_vmem = 64 << 20                       # conservative (v7x per-TC)
    vmem_cap = (phys_vmem * 3) // 4                # leave compiler headroom
    vmem_limit = int(min(max(est, 8 << 20), vmem_cap))

    kernel = functools.partial(_unetup_kernel, hout=hout, wout=wout)

    def build(weight_pipeline_mode):
        if weight_pipeline_mode is None:
            w_spec = pl.BlockSpec((2, kp, c_blk), lambda i, j: (0, 0, j))
        else:
            w_spec = pl.BlockSpec((2, kp, c_blk), lambda i, j: (0, 0, j),
                                  pipeline_mode=weight_pipeline_mode)
        return pl.pallas_call(
            kernel,
            out_shape=jax.ShapeDtypeStruct((n, m, cp), jnp.bfloat16),
            grid_spec=pltpu.PrefetchScalarGridSpec(
                num_scalar_prefetch=0,
                grid=(n, n_cblk),
                in_specs=[
                    pl.BlockSpec((1, hh, wout, kp), lambda i, j: (i, 0, 0, 0)),
                    w_spec,
                ],
                out_specs=pl.BlockSpec((1, m, c_blk), lambda i, j: (i, 0, j)),
                scratch_shapes=[pltpu.VMEM((m, c_blk), jnp.float32)],
            ),
            compiler_params=pltpu.CompilerParams(
                dimension_semantics=("parallel", "parallel"),
                vmem_limit_bytes=vmem_limit),
        )

    if single_buffer_w:
        # Weight block index is constant over the whole grid -> fetched once;
        # single-buffer it to save one weight-sized VMEM buffer.  Fall back to
        # the default pipelining if this JAX build rejects Buffered(1).
        try:
            out = build(pl.Buffered(1))(xf, wf)
        except Exception:
            out = build(None)(xf, wf)
    else:
        out = build(None)(xf, wf)

    out = out[:, :, :cout].reshape(n, hout, wout, cout)
    if nchw_out:
        out = jnp.transpose(out, (0, 3, 1, 2))  # back to NCHW (module parity)
    return out


def _reference(x_nchw, weight_hwio, bias, skip_nchw=None):
    """Pure-JAX f32 reference matching the PyTorch module semantics."""
    if skip_nchw is not None:
        x_nchw = jnp.concatenate([x_nchw, skip_nchw], axis=1)
    w_oihw = jnp.transpose(weight_hwio, (3, 2, 0, 1))
    y = jax.lax.conv_general_dilated(
        x_nchw, w_oihw, window_strides=(2, 2), padding=((1, 1), (1, 1)),
        dimension_numbers=("NCHW", "OIHW", "NCHW"))
    y = y + bias[None, :, None, None]
    mean = jnp.mean(y, axis=(2, 3), keepdims=True)
    var = jnp.mean((y - mean) ** 2, axis=(2, 3), keepdims=True)
    y = (y - mean) / jnp.sqrt(var + 1e-5)
    return jnp.maximum(y, 0.0)


if __name__ == "__main__":
    # Small deterministic setup: UNetUp(in_channels=8, out_channels=4, k=4),
    # x has 4 channels, skip has 4 channels -> concatenated in_channels = 8.
    key = jax.random.PRNGKey(0)
    kx, ks, kw_, kb = jax.random.split(key, 4)

    batch, cx, cskip, hgt, wid = 2, 4, 4, 16, 16
    in_ch, out_ch, ksize = cx + cskip, 4, 4

    x = jax.random.normal(kx, (batch, cx, hgt, wid), dtype=jnp.float32)
    skip = jax.random.normal(ks, (batch, cskip, hgt, wid), dtype=jnp.float32)

    fan_in = in_ch * ksize * ksize
    bound = 1.0 / np.sqrt(fan_in)
    weight_hwio = jax.random.uniform(
        kw_, (ksize, ksize, in_ch, out_ch), jnp.float32, -bound, bound)
    bias = jax.random.uniform(kb, (out_ch,), jnp.float32, -bound, bound)

    out = unet_up_forward(x, weight_hwio, bias, skip)
    out = jax.block_until_ready(out)
    assert out.shape == (batch, out_ch, hgt // 2, wid // 2)
    assert out.dtype == jnp.bfloat16

    # The kernel computes the conv with bf16 inputs (f32 MXU accumulation) and
    # stores bf16; compare against the f32 reference fed the same bf16-rounded
    # inputs so the check isolates kernel correctness from that intentional
    # quantization.  The reference keeps the conv bias; the kernel omits it
    # (InstanceNorm cancels it exactly).  Tolerance covers the bf16 output
    # cast (~2^-9 relative) and the fused E[x^2]-mean^2 variance.
    q = lambda a: a.astype(jnp.bfloat16).astype(jnp.float32)
    ref = _reference(q(x), q(weight_hwio), bias, q(skip))
    np.testing.assert_allclose(np.asarray(out.astype(jnp.float32)),
                               np.asarray(ref), rtol=2e-2, atol=2e-2)
    print("KERNEL_OK")
</pallas_src>

<mosaic_0001>
module attributes {stable_mosaic.version = 11 : i64} {
  func.func @_unetup_kernel(%arg0: i32, %arg1: i32, %arg2: memref<1x9x8x128xbf16, #tpu.memory_space<vmem>>, %arg3: memref<2x128x128xbf16, #tpu.memory_space<vmem>>, %arg4: memref<1x64x128xbf16, #tpu.memory_space<vmem>>, %arg5: memref<64x128xf32, #tpu.memory_space<vmem>>) attributes {dimension_semantics = [#tpu.dimension_semantics<parallel>, #tpu.dimension_semantics<parallel>], iteration_bounds = array<i64: 2, 1>, scalar_prefetch = 0 : i64, scratch_operands = 1 : i64, tpu.core_type = #tpu.core_type<tc>, window_params = [{transform_indices = @transform_0, window_bounds = array<i64: 1, 9, 8, 128>}, {pipeline_mode = #tpu.pipeline_mode<synchronous>, transform_indices = @transform_1, window_bounds = array<i64: 2, 128, 128>}, {transform_indices = @transform_2, window_bounds = array<i64: 1, 64, 128>}]} {
    %c0 = arith.constant 0 : index
    %c0_0 = arith.constant 0 : index
    %c0_1 = arith.constant 0 : index
    %c0_2 = arith.constant 0 : index
    %0 = vector.load %arg2[%c0, %c0_0, %c0_1, %c0_2] : memref<1x9x8x128xbf16, #tpu.memory_space<vmem>>, vector<1x8x8x128xbf16>
    %1 = vector.shape_cast %0 : vector<1x8x8x128xbf16> to vector<8x8x128xbf16>
    %2 = vector.shape_cast %1 : vector<8x8x128xbf16> to vector<64x128xbf16>
    %c0_3 = arith.constant 0 : index
    %c0_4 = arith.constant 0 : index
    %c0_5 = arith.constant 0 : index
    %3 = vector.load %arg3[%c0_3, %c0_4, %c0_5] : memref<2x128x128xbf16, #tpu.memory_space<vmem>>, vector<1x128x128xbf16>
    %4 = vector.shape_cast %3 : vector<1x128x128xbf16> to vector<128x128xbf16>
    %cst = arith.constant dense<0.000000e+00> : vector<64x128xf32>
    %5 = tpu.matmul %2, %4, %cst {dimension_numbers = #tpu.dot_dimension_numbers<[1], [0], [0], [1], [0, 0, 1, 1], [], []>} : vector<64x128xbf16>, vector<128x128xbf16>, vector<64x128xf32> -> vector<64x128xf32>
    %c0_6 = arith.constant 0 : index
    %c0_7 = arith.constant 0 : index
    %6 = vector.load %arg5[%c0_6, %c0_7] : memref<64x128xf32, #tpu.memory_space<vmem>>, vector<64x128xf32>
    tpu.vector_store %arg5[%c0_6, %c0_7], %5 {strides = array<i32>} : memref<64x128xf32, #tpu.memory_space<vmem>>, vector<64x128xf32>,
    %c0_8 = arith.constant 0 : index
    %c1 = arith.constant 1 : index
    %c0_9 = arith.constant 0 : index
    %c0_10 = arith.constant 0 : index
    %7 = vector.load %arg2[%c0_8, %c1, %c0_9, %c0_10] : memref<1x9x8x128xbf16, #tpu.memory_space<vmem>>, vector<1x8x8x128xbf16>
    %8 = vector.shape_cast %7 : vector<1x8x8x128xbf16> to vector<8x8x128xbf16>
    %9 = vector.shape_cast %8 : vector<8x8x128xbf16> to vector<64x128xbf16>
    %c0_11 = arith.constant 0 : index
    %c0_12 = arith.constant 0 : index
    %10 = vector.load %arg5[%c0_11, %c0_12] : memref<64x128xf32, #tpu.memory_space<vmem>>, vector<64x128xf32>
    %c1_13 = arith.constant 1 : index
    %c0_14 = arith.constant 0 : index
    %c0_15 = arith.constant 0 : index
    %11 = vector.load %arg3[%c1_13, %c0_14, %c0_15] : memref<2x128x128xbf16, #tpu.memory_space<vmem>>, vector<1x128x128xbf16>
    %12 = vector.shape_cast %11 : vector<1x128x128xbf16> to vector<128x128xbf16>
    %cst_16 = arith.constant dense<0.000000e+00> : vector<64x128xf32>
    %13 = tpu.matmul %9, %12, %cst_16 {dimension_numbers = #tpu.dot_dimension_numbers<[1], [0], [0], [1], [0, 0, 1, 1], [], []>} : vector<64x128xbf16>, vector<128x128xbf16>, vector<64x128xf32> -> vector<64x128xf32>
    %14 = arith.addf %10, %13 : vector<64x128xf32>
    %c0_17 = arith.constant 0 : index
    %c0_18 = arith.constant 0 : index
    %15 = vector.load %arg5[%c0_17, %c0_18] : memref<64x128xf32, #tpu.memory_space<vmem>>, vector<64x128xf32>
    tpu.vector_store %arg5[%c0_17, %c0_18], %14 {strides = array<i32>} : memref<64x128xf32, #tpu.memory_space<vmem>>, vector<64x128xf32>,
    %c0_19 = arith.constant 0 : index
    %c0_20 = arith.constant 0 : index
    %16 = vector.load %arg5[%c0_19, %c0_20] : memref<64x128xf32, #tpu.memory_space<vmem>>, vector<64x128xf32>
    %cst_21 = arith.constant dense<0.000000e+00> : vector<128xf32>
    %17 = vector.multi_reduction <add>, %16, %cst_21 [0] : vector<64x128xf32> to vector<128xf32>
    %18 = vector.shape_cast %17 : vector<128xf32> to vector<1x128xf32>
    %cst_22 = arith.constant 1.562500e-02 : f32
    %19 = vector.broadcast %cst_22 : f32 to vector<1x128xf32>
    %20 = arith.mulf %18, %19 : vector<1x128xf32>
    %21 = arith.mulf %16, %16 : vector<64x128xf32>
    %cst_23 = arith.constant dense<0.000000e+00> : vector<128xf32>
    %22 = vector.multi_reduction <add>, %21, %cst_23 [0] : vector<64x128xf32> to vector<128xf32>
    %23 = vector.shape_cast %22 : vector<128xf32> to vector<1x128xf32>
    %cst_24 = arith.constant 1.562500e-02 : f32
    %24 = vector.broadcast %cst_24 : f32 to vector<1x128xf32>
    %25 = arith.mulf %23, %24 : vector<1x128xf32>
    %26 = arith.mulf %20, %20 : vector<1x128xf32>
    %27 = arith.subf %25, %26 : vector<1x128xf32>
    %cst_25 = arith.constant 0.000000e+00 : f32
    %28 = vector.broadcast %cst_25 : f32 to vector<1x128xf32>
    %29 = arith.maximumf %27, %28 : vector<1x128xf32>
    %cst_26 = arith.constant 9.99999974E-6 : f32
    %30 = vector.broadcast %cst_26 : f32 to vector<1x128xf32>
    %31 = arith.addf %29, %30 : vector<1x128xf32>
    %32 = math.rsqrt %31 : vector<1x128xf32>
    %33 = vector.broadcast %20 : vector<1x128xf32> to vector<64x128xf32>
    %34 = arith.subf %16, %33 : vector<64x128xf32>
    %35 = vector.broadcast %32 : vector<1x128xf32> to vector<64x128xf32>
    %36 = arith.mulf %34, %35 : vector<64x128xf32>
    %cst_27 = arith.constant 0.000000e+00 : f32
    %37 = vector.broadcast %cst_27 : f32 to vector<64x128xf32>
    %38 = arith.maximumf %36, %37 : vector<64x128xf32>
    %39 = arith.truncf %38 : vector<64x128xf32> to vector<64x128xbf16>
    %c0_28 = arith.constant 0 : index
    %c0_29 = arith.constant 0 : index
    %c0_30 = arith.constant 0 : index
    %40 = vector.load %arg4[%c0_28, %c0_29, %c0_30] : memref<1x64x128xbf16, #tpu.memory_space<vmem>>, vector<1x64x128xbf16>
    %41 = vector.shape_cast %40 : vector<1x64x128xbf16> to vector<64x128xbf16>
    %42 = vector.shape_cast %39 : vector<64x128xbf16> to vector<1x64x128xbf16>
    tpu.vector_store %arg4[%c0_28, %c0_29, %c0_30], %42 {strides = array<i32>} : memref<1x64x128xbf16, #tpu.memory_space<vmem>>, vector<1x64x128xbf16>,
    return
  }
  func.func @transform_0(%arg0: i32, %arg1: i32) -> (i32, i32, i32, i32) {
    %c0_i32 = arith.constant 0 : i32
    %c0_i32_0 = arith.constant 0 : i32
    %c0_i32_1 = arith.constant 0 : i32
    %c0_i32_2 = arith.constant 0 : i32
    return %arg0, %c0_i32, %c0_i32_0, %c0_i32_1 : i32, i32, i32, i32
  }
  func.func @transform_1(%arg0: i32, %arg1: i32) -> (i32, i32, i32) {
    %c0_i32 = arith.constant 0 : i32
    %c0_i32_0 = arith.constant 0 : i32
    %c0_i32_1 = arith.constant 0 : i32
    return %c0_i32, %c0_i32_0, %arg1 : i32, i32, i32
  }
  func.func @transform_2(%arg0: i32, %arg1: i32) -> (i32, i32, i32) {
    %c0_i32 = arith.constant 0 : i32
    %c0_i32_0 = arith.constant 0 : i32
    return %arg0, %c0_i32, %arg1 : i32, i32, i32
  }
}

module attributes {stable_mosaic.version = 11 : i64} {
  func.func @_unetup_kernel(%arg0: i32, %arg1: i32, %arg2: memref<1x9x8x128xbf16, #tpu.memory_space<vmem>>, %arg3: memref<2x128x128xbf16, #tpu.memory_space<vmem>>, %arg4: memref<1x64x128xbf16, #tpu.memory_space<vmem>>, %arg5: memref<64x128xf32, #tpu.memory_space<vmem>>) attributes {dimension_semantics = [#tpu.dimension_semantics<parallel>, #tpu.dimension_semantics<parallel>], iteration_bounds = array<i64: 2, 1>, scalar_prefetch = 0 : i64, scratch_operands = 1 : i64, tpu.core_type = #tpu.core_type<tc>, window_params = [{transform_indices = @transform_0, window_bounds = array<i64: 1, 9, 8, 128>}, {transform_indices = @transform_1, window_bounds = array<i64: 2, 128, 128>}, {transform_indices = @transform_2, window_bounds = array<i64: 1, 64, 128>}]} {
    %c0 = arith.constant 0 : index
    %c0_0 = arith.constant 0 : index
    %c0_1 = arith.constant 0 : index
    %c0_2 = arith.constant 0 : index
    %0 = vector.load %arg2[%c0, %c0_0, %c0_1, %c0_2] : memref<1x9x8x128xbf16, #tpu.memory_space<vmem>>, vector<1x8x8x128xbf16>
    %1 = vector.shape_cast %0 : vector<1x8x8x128xbf16> to vector<8x8x128xbf16>
    %2 = vector.shape_cast %1 : vector<8x8x128xbf16> to vector<64x128xbf16>
    %c0_3 = arith.constant 0 : index
    %c0_4 = arith.constant 0 : index
    %c0_5 = arith.constant 0 : index
    %3 = vector.load %arg3[%c0_3, %c0_4, %c0_5] : memref<2x128x128xbf16, #tpu.memory_space<vmem>>, vector<1x128x128xbf16>
    %4 = vector.shape_cast %3 : vector<1x128x128xbf16> to vector<128x128xbf16>
    %cst = arith.constant dense<0.000000e+00> : vector<64x128xf32>
    %5 = tpu.matmul %2, %4, %cst {dimension_numbers = #tpu.dot_dimension_numbers<[1], [0], [0], [1], [0, 0, 1, 1], [], []>} : vector<64x128xbf16>, vector<128x128xbf16>, vector<64x128xf32> -> vector<64x128xf32>
    %c0_6 = arith.constant 0 : index
    %c0_7 = arith.constant 0 : index
    %6 = vector.load %arg5[%c0_6, %c0_7] : memref<64x128xf32, #tpu.memory_space<vmem>>, vector<64x128xf32>
    tpu.vector_store %arg5[%c0_6, %c0_7], %5 {strides = array<i32>} : memref<64x128xf32, #tpu.memory_space<vmem>>, vector<64x128xf32>,
    %c0_8 = arith.constant 0 : index
    %c1 = arith.constant 1 : index
    %c0_9 = arith.constant 0 : index
    %c0_10 = arith.constant 0 : index
    %7 = vector.load %arg2[%c0_8, %c1, %c0_9, %c0_10] : memref<1x9x8x128xbf16, #tpu.memory_space<vmem>>, vector<1x8x8x128xbf16>
    %8 = vector.shape_cast %7 : vector<1x8x8x128xbf16> to vector<8x8x128xbf16>
    %9 = vector.shape_cast %8 : vector<8x8x128xbf16> to vector<64x128xbf16>
    %c0_11 = arith.constant 0 : index
    %c0_12 = arith.constant 0 : index
    %10 = vector.load %arg5[%c0_11, %c0_12] : memref<64x128xf32, #tpu.memory_space<vmem>>, vector<64x128xf32>
    %c1_13 = arith.constant 1 : index
    %c0_14 = arith.constant 0 : index
    %c0_15 = arith.constant 0 : index
    %11 = vector.load %arg3[%c1_13, %c0_14, %c0_15] : memref<2x128x128xbf16, #tpu.memory_space<vmem>>, vector<1x128x128xbf16>
    %12 = vector.shape_cast %11 : vector<1x128x128xbf16> to vector<128x128xbf16>
    %cst_16 = arith.constant dense<0.000000e+00> : vector<64x128xf32>
    %13 = tpu.matmul %9, %12, %cst_16 {dimension_numbers = #tpu.dot_dimension_numbers<[1], [0], [0], [1], [0, 0, 1, 1], [], []>} : vector<64x128xbf16>, vector<128x128xbf16>, vector<64x128xf32> -> vector<64x128xf32>
    %14 = arith.addf %10, %13 : vector<64x128xf32>
    %c0_17 = arith.constant 0 : index
    %c0_18 = arith.constant 0 : index
    %15 = vector.load %arg5[%c0_17, %c0_18] : memref<64x128xf32, #tpu.memory_space<vmem>>, vector<64x128xf32>
    tpu.vector_store %arg5[%c0_17, %c0_18], %14 {strides = array<i32>} : memref<64x128xf32, #tpu.memory_space<vmem>>, vector<64x128xf32>,
    %c0_19 = arith.constant 0 : index
    %c0_20 = arith.constant 0 : index
    %16 = vector.load %arg5[%c0_19, %c0_20] : memref<64x128xf32, #tpu.memory_space<vmem>>, vector<64x128xf32>
    %cst_21 = arith.constant dense<0.000000e+00> : vector<128xf32>
    %17 = vector.multi_reduction <add>, %16, %cst_21 [0] : vector<64x128xf32> to vector<128xf32>
    %18 = vector.shape_cast %17 : vector<128xf32> to vector<1x128xf32>
    %cst_22 = arith.constant 1.562500e-02 : f32
    %19 = vector.broadcast %cst_22 : f32 to vector<1x128xf32>
    %20 = arith.mulf %18, %19 : vector<1x128xf32>
    %21 = arith.mulf %16, %16 : vector<64x128xf32>
    %cst_23 = arith.constant dense<0.000000e+00> : vector<128xf32>
    %22 = vector.multi_reduction <add>, %21, %cst_23 [0] : vector<64x128xf32> to vector<128xf32>
    %23 = vector.shape_cast %22 : vector<128xf32> to vector<1x128xf32>
    %cst_24 = arith.constant 1.562500e-02 : f32
    %24 = vector.broadcast %cst_24 : f32 to vector<1x128xf32>
    %25 = arith.mulf %23, %24 : vector<1x128xf32>
    %26 = arith.mulf %20, %20 : vector<1x128xf32>
    %27 = arith.subf %25, %26 : vector<1x128xf32>
    %cst_25 = arith.constant 0.000000e+00 : f32
    %28 = vector.broadcast %cst_25 : f32 to vector<1x128xf32>
    %29 = arith.maximumf %27, %28 : vector<1x128xf32>
    %cst_26 = arith.constant 9.99999974E-6 : f32
    %30 = vector.broadcast %cst_26 : f32 to vector<1x128xf32>
    %31 = arith.addf %29, %30 : vector<1x128xf32>
    %32 = math.rsqrt %31 : vector<1x128xf32>
    %33 = vector.broadcast %20 : vector<1x128xf32> to vector<64x128xf32>
    %34 = arith.subf %16, %33 : vector<64x128xf32>
    %35 = vector.broadcast %32 : vector<1x128xf32> to vector<64x128xf32>
    %36 = arith.mulf %34, %35 : vector<64x128xf32>
    %cst_27 = arith.constant 0.000000e+00 : f32
    %37 = vector.broadcast %cst_27 : f32 to vector<64x128xf32>
    %38 = arith.maximumf %36, %37 : vector<64x128xf32>
    %39 = arith.truncf %38 : vector<64x128xf32> to vector<64x128xbf16>
    %c0_28 = arith.constant 0 : index
    %c0_29 = arith.constant 0 : index
    %c0_30 = arith.constant 0 : index
    %40 = vector.load %arg4[%c0_28, %c0_29, %c0_30] : memref<1x64x128xbf16, #tpu.memory_space<vmem>>, vector<1x64x128xbf16>
    %41 = vector.shape_cast %40 : vector<1x64x128xbf16> to vector<64x128xbf16>
    %42 = vector.shape_cast %39 : vector<64x128xbf16> to vector<1x64x128xbf16>
    tpu.vector_store %arg4[%c0_28, %c0_29, %c0_30], %42 {strides = array<i32>} : memref<1x64x128xbf16, #tpu.memory_space<vmem>>, vector<1x64x128xbf16>,
    return
  }
  func.func @transform_0(%arg0: i32, %arg1: i32) -> (i32, i32, i32, i32) {
    %c0_i32 = arith.constant 0 : i32
    %c0_i32_0 = arith.constant 0 : i32
    %c0_i32_1 = arith.constant 0 : i32
    %c0_i32_2 = arith.constant 0 : i32
    return %arg0, %c0_i32, %c0_i32_0, %c0_i32_1 : i32, i32, i32, i32
  }
  func.func @transform_1(%arg0: i32, %arg1: i32) -> (i32, i32, i32) {
    %c0_i32 = arith.constant 0 : i32
    %c0_i32_0 = arith.constant 0 : i32
    %c0_i32_1 = arith.constant 0 : i32
    return %c0_i32, %c0_i32_0, %arg1 : i32, i32, i32
  }
  func.func @transform_2(%arg0: i32, %arg1: i32) -> (i32, i32, i32) {
    %c0_i32 = arith.constant 0 : i32
    %c0_i32_0 = arith.constant 0 : i32
    return %arg0, %c0_i32, %arg1 : i32, i32, i32
  }
}

</mosaic_0001>

<llo_original>
// kernel: tpu_custom_call.1
$region0: #{tpu_custom_call.1}
  #allocation0 [shape = 'u32[]', space=smem, size = 0x4, offset = 0x4, fixed_abs, tag = 'smem constant byte address 0x4 - core index']
  #allocation1 [shape = 'u32[72,128]{1,0:T(1,128)}', space=vmem, size = 0x9000, scoped, tag = 'internal scratch']
  #allocation2 [shape = 'f32[64,128]{1,0:T(8,128)}', space=vmem, size = 0x8000, scoped, tag = 'scratch operand']
  %s0 = inlined_call_operand.hbm [shape: bf16[2,9,8,128], index: 0, kind: input, shape index: {}]
  %s1 = inlined_call_operand.hbm [shape: bf16[2,128,128], index: 1, kind: input, shape index: {}]
  %s2 = inlined_call_operand.hbm [shape: bf16[2,64,128], index: 2, kind: output, shape index: {}]
  %s3 = sld [smem:[#allocation0]]
  $region49: #{tpu_custom_call.1} parent=0
    _
  %s5 = ssub.s32 1, %s3
  %s6 = scalar_select 0, %s5, %s3
  $region1: #{tpu_custom_call.1} parent=0
    #allocation3 [shape = 'u8[36864]{0}', space=vmem, size = 0x9000, scoped, tag = 'input window, operand 0']
    #allocation4 [shape = 's32[2]{0}', space=sflag, size = 0x8, scoped, tag = 'scoped memory for tpu_custom_call.1']
    #allocation5 [shape = 's32[2]{0}', space=sflag, size = 0x8, scoped, tag = 'scoped memory for tpu_custom_call.1']
    #allocation6 [shape = 'u8[65536]{0}', space=vmem, size = 0x10000, scoped, tag = 'input window, operand 1, single buffered']
    #allocation7 [shape = 's32[1]{0}', space=sflag, size = 0x4, scoped, tag = 'scoped memory for tpu_custom_call.1']
    #allocation8 [shape = 'u8[32768]{0}', space=vmem, size = 0x8000, scoped, tag = 'output window, operand 0']
    %7 = vsyncpa [#allocation4], 0
    %s8 = scalar_lea.sflag [#allocation4], 1
    %9 = vsyncpa %s8, 0
    %10 = vsyncpa [#allocation7], 0
    %11 = vsyncpa [#allocation5], 0
    %s12 = scalar_lea.sflag [#allocation5], 1
    %13 = vsyncpa %s12, 0
    loop: start=0, step=1, limit=4
    $region2: #{tpu_custom_call.1} parent=1 // loop_pre_header
      _
    $region3: #{tpu_custom_call.1} parent=1 // loop_header
      %s15 = sphi 0, %s19
      %p16 = scmp.ge.s32.totalorder %s15, 4
      %s22 = sphi 0, %s34
      %s23 = sphi 0, %s30
      %s24 = sphi 0, %s22
      %s25 = sphi 0, %s23
      %s26 = sphi 0, %s24
      %s27 = sphi 0, %s25
      %s37 = sphi 0, %s39
      %s40 = sphi 0, %s37
      %s41 = sphi 0, %s40
      %s57 = sphi 0, %s41
      %s63 = sphi 0, %s65
      %s66 = sphi 0, %s63
      %s67 = sphi 0, %s66
      %s83 = sphi 0, %s67
      %s91 = sphi 0, %s93
      %s94 = sphi 0, %s91
      %s95 = sphi 0, %s94
      %s111 = sphi 0, %s95
    $region4: #{tpu_custom_call.1} parent=1 // loop_header_branch
      %18 = sbr.rel (%p16) target = $region8
    $region5: #{tpu_custom_call.1} parent=1 // loop_body
      %s20 = ssub.s32 %s15, 1
      %s21 = ssub.s32 %s15, 2
      %s28 = sadd.s32 1, %s23
      %p29 = scmp.ge.s32.totalorder %s28, 1
      %s30 = scalar_select %p29, 0, %s28
      %s31 = sadd.s32 1, %s22
      %s32 = scalar_select %p29, %s31, %s22
      %p33 = scmp.ge.s32.totalorder %s32, 2
      %s34 = scalar_select %p33, 0, %s32
      %s35 = ssub.s32 %s22, %s34
      %p36 = scmp.eq.s32.totalorder %s35, 0
      %s38 = sadd.s32 %s37, 1
      %s39 = scalar_select %p36, %s37, %s38
      %p42 = pneg %p36
      %p43 = scmp.eq.s32.totalorder %s15, 1
      %p44 = por %p42, %p43
      %p45 = scmp.ne.s32.totalorder %s37, %s40
      %p46 = scmp.eq.s32.totalorder %s15, 0
      %p47 = por %p45, %p46
      %p48 = scmp.ne.s32.totalorder %s37, %s40
      %p49 = scmp.eq.s32.totalorder %s20, 1
      %p50 = por %p48, %p49
      %p51 = scmp.ne.s32.totalorder %s40, %s41
      %p52 = scmp.eq.s32.totalorder %s20, 0
      %p53 = por %p51, %p52
      %p54 = scmp.ne.s32.totalorder %s40, %s41
      %p55 = scmp.eq.s32.totalorder %s21, 1
      %p56 = por %p54, %p55
      %p58 = scmp.ne.s32.totalorder %s41, %s57
      %p59 = scmp.eq.s32.totalorder %s21, 0
      %p60 = por %p58, %p59
      %s61 = ssub.s32 %s23, %s30
      %p62 = scmp.eq.s32.totalorder %s61, 0
      %s64 = sadd.s32 %s63, 1
      %s65 = scalar_select %p62, %s63, %s64
      %p68 = pneg %p62
      %p69 = scmp.eq.s32.totalorder %s15, 1
      %p70 = por %p68, %p69
      %p71 = scmp.ne.s32.totalorder %s63, %s66
      %p72 = scmp.eq.s32.totalorder %s15, 0
      %p73 = por %p71, %p72
      %p74 = scmp.ne.s32.totalorder %s63, %s66
      %p75 = scmp.eq.s32.totalorder %s20, 1
      %p76 = por %p74, %p75
      %p77 = scmp.ne.s32.totalorder %s66, %s67
      %p78 = scmp.eq.s32.totalorder %s20, 0
      %p79 = por %p77, %p78
      %p80 = scmp.ne.s32.totalorder %s66, %s67
      %p81 = scmp.eq.s32.totalorder %s21, 1
      %p82 = por %p80, %p81
      %p84 = scmp.ne.s32.totalorder %s67, %s83
      %p85 = scmp.eq.s32.totalorder %s21, 0
      %p86 = por %p84, %p85
      %s87 = ssub.s32 %s22, %s34
      %s88 = ssub.s32 %s23, %s30
      %s89 = sor.u32 %s87, %s88
      %p90 = scmp.eq.s32.totalorder %s89, 0
      %s92 = sadd.s32 %s91, 1
      %s93 = scalar_select %p90, %s91, %s92
      %p96 = pneg %p90
      %p97 = scmp.eq.s32.totalorder %s15, 1
      %p98 = por %p96, %p97
      %p99 = scmp.ne.s32.totalorder %s91, %s94
      %p100 = scmp.eq.s32.totalorder %s15, 0
      %p101 = por %p99, %p100
      %p102 = scmp.ne.s32.totalorder %s91, %s94
      %p103 = scmp.eq.s32.totalorder %s20, 1
      %p104 = por %p102, %p103
      %p105 = scmp.ne.s32.totalorder %s94, %s95
      %p106 = scmp.eq.s32.totalorder %s20, 0
      %p107 = por %p105, %p106
      %p108 = scmp.ne.s32.totalorder %s94, %s95
      %p109 = scmp.eq.s32.totalorder %s21, 1
      %p110 = por %p108, %p109
      %p112 = scmp.ne.s32.totalorder %s95, %s111
      %p113 = scmp.eq.s32.totalorder %s21, 0
      %p114 = por %p112, %p113
      %p115 = scmp.le.s32.totalorder 1, %s15
      %p116 = scmp.lt.s32.totalorder %s15, 3
      %p117 = pnand %p115, %p116
      %p118 = pneg %p117
      // Predicated region
      $region9: #{tpu_custom_call.1} parent=5 // pred_check
        _
      $region10: #{tpu_custom_call.1} parent=5 // pred_check_branch
        %120 = sbr.rel (%p117) target = $region12
      $region11: #{tpu_custom_call.1} parent=5 // pred_region
        %s121 = ssub.s32 %s15, 1
        // Predicated region
        $region13: #{tpu_custom_call.1} parent=11 // pred_check
          %p122 = pneg %p79
        $region14: #{tpu_custom_call.1} parent=11 // pred_check_branch
          %124 = sbr.rel (%p122) target = $region16
        $region15: #{tpu_custom_call.1} parent=11 // pred_region
          %126 = vsyncadd [#allocation7], 0
          %s127 = smul.addr %s25, 4
          %s128 = scalar_lea.hbm %s1, %s127
          %s129 = sshll.u32 %s128, 4
          %s130 = int_to_ptr.hbm [resolvable:$true] %s129
          %s131 = sshll.u32 [#allocation6], 4
          %s132 = int_to_ptr.vmem [resolvable:$true] %s131
          %137 = dma.hbm_to_vmem [thread:$0]  %s130, 2048, %s132, [#allocation7], 64, 64, 4
        $region16: #{tpu_custom_call.1} parent=11 // pred_fallthru
          _
      $region12: #{tpu_custom_call.1} parent=5 // pred_fallthru
        _
      %p138 = scmp.lt.s32.totalorder %s15, 2
      // Predicated region
      $region17: #{tpu_custom_call.1} parent=5 // pred_check
        %p139 = pneg %p138
      $region18: #{tpu_custom_call.1} parent=5 // pred_check_branch
        %141 = sbr.rel (%p139) target = $region20
      $region19: #{tpu_custom_call.1} parent=5 // pred_region
        // Predicated region
        $region21: #{tpu_custom_call.1} parent=19 // pred_check
          %p142 = pneg %p47
        $region22: #{tpu_custom_call.1} parent=19 // pred_check_branch
          %144 = sbr.rel (%p142) target = $region24
        $region23: #{tpu_custom_call.1} parent=19 // pred_region
          %s145 = sand.u32 %s37, 1
          %s146 = scalar_lea.sflag [#allocation4], %s145
          %s147 = sand.u32 %s37, 1
          %s148 = smul.addr %s147, 36
          %s149 = scalar_lea.vmem [#allocation3], %s148
          %151 = vsyncadd %s146, 0
          %s152 = smul.addr %s22, 9
          %s153 = smul.addr %s152, 4
          %s154 = scalar_lea.hbm %s0, %s153
          %s155 = sshll.u32 %s154, 4
          %s156 = int_to_ptr.hbm [resolvable:$true] %s155
          %s157 = sshll.u32 %s149, 4
          %s158 = int_to_ptr.vmem [resolvable:$true] %s157
          %163 = dma.hbm_to_vmem [thread:$0]  %s156, 576, %s158, %s146, 64, 64, 4
        $region24: #{tpu_custom_call.1} parent=19 // pred_fallthru
          _
      $region20: #{tpu_custom_call.1} parent=5 // pred_fallthru
        _
      %p164 = scmp.le.s32.totalorder 1, %s15
      %p165 = scmp.lt.s32.totalorder %s15, 3
      %p166 = pnand %p164, %p165
      %p167 = pneg %p166
      // Predicated region
      $region25: #{tpu_custom_call.1} parent=5 // pred_check
        _
      $region26: #{tpu_custom_call.1} parent=5 // pred_check_branch
        %169 = sbr.rel (%p166) target = $region28
      $region27: #{tpu_custom_call.1} parent=5 // pred_region
        %s170 = ssub.s32 %s15, 1
        %s171 = sand.u32 %s40, 1
        %s172 = scalar_lea.sflag [#allocation4], %s171
        %s173 = sand.u32 %s40, 1
        %s174 = smul.addr %s173, 36
        %s175 = scalar_lea.vmem [#allocation3], %s174
        // Predicated region
        $region29: #{tpu_custom_call.1} parent=27 // pred_check
          %p176 = pneg %p53
        $region30: #{tpu_custom_call.1} parent=27 // pred_check_branch
          %178 = sbr.rel (%p176) target = $region32
        $region31: #{tpu_custom_call.1} parent=27 // pred_region
          %180 = dma.done %s172, 576
        $region32: #{tpu_custom_call.1} parent=27 // pred_fallthru
          _
        // Predicated region
        $region33: #{tpu_custom_call.1} parent=27 // pred_check
          %p181 = pneg %p79
        $region34: #{tpu_custom_call.1} parent=27 // pred_check_branch
          %183 = sbr.rel (%p181) target = $region36
        $region35: #{tpu_custom_call.1} parent=27 // pred_region
          %185 = dma.done [#allocation7], 2048
        $region36: #{tpu_custom_call.1} parent=27 // pred_fallthru
          _
        %s186 = sand.u32 %s40, 1
        %s187 = scalar_lea.sflag [#allocation4], %s186
        %s188 = sand.u32 %s40, 1
        %s189 = smul.addr %s188, 36
        %s190 = scalar_lea.vmem [#allocation3], %s189
        %p191 = pneg %p53
        %p192 = pneg %p50
        %p193 = pneg %p79
        %p194 = pneg %p76
        %p195 = pneg %p107
        %p196 = pneg %p104
        %s197 = sand.u32 %s94, 1
        %s198 = scalar_lea.sflag [#allocation5], %s197
        %s199 = sand.u32 %s94, 1
        %s200 = smul.addr %s199, 32
        %s201 = scalar_lea.vmem [#allocation8], %s200
        %v202 = vld [vmem:[%s175] sm:$0xf]
        %v203 = vld [vmem:[%s175 + $0x4] sm:$0xf]
        %v204 = vld [vmem:[%s175 + $0x8] sm:$0xf]
        %v205 = vld [vmem:[%s175 + $0xc] sm:$0xf]
        %v206 = vld [vmem:[%s175 + $0x10] sm:$0xf]
        %v207 = vld [vmem:[%s175 + $0x14] sm:$0xf]
        %v208 = vld [vmem:[%s175 + $0x18] sm:$0xf]
        %v209 = vld [vmem:[%s175 + $0x1c] sm:$0xf]
        %v210 = vld [vmem:[#allocation6] sm:$0xf]
        %v211 = vld [vmem:[#allocation6 + $0x4] sm:$0xf]
        %v212 = vld [vmem:[#allocation6 + $0x8] sm:$0xf]
        %v213 = vld [vmem:[#allocation6 + $0xc] sm:$0xf]
        %v214 = vld [vmem:[#allocation6 + $0x10] sm:$0xf]
        %v215 = vld [vmem:[#allocation6 + $0x14] sm:$0xf]
        %v216 = vld [vmem:[#allocation6 + $0x18] sm:$0xf]
        %v217 = vld [vmem:[#allocation6 + $0x1c] sm:$0xf]
        %v218 = vld [vmem:[#allocation6 + $0x20] sm:$0xf]
        %v219 = vld [vmem:[#allocation6 + $0x24] sm:$0xf]
        %v220 = vld [vmem:[#allocation6 + $0x28] sm:$0xf]
        %v221 = vld [vmem:[#allocation6 + $0x2c] sm:$0xf]
        %v222 = vld [vmem:[#allocation6 + $0x30] sm:$0xf]
        %v223 = vld [vmem:[#allocation6 + $0x34] sm:$0xf]
        %v224 = vld [vmem:[#allocation6 + $0x38] sm:$0xf]
        %v225 = vld [vmem:[#allocation6 + $0x3c] sm:$0xf]
        %v234 = vunpack.c.l.b16 %v202
        %v235 = vunpack.c.l.b16 %v203
        %v236 = vunpack.c.l.b16 %v204
        %v237 = vunpack.c.l.b16 %v205
        %v238 = vunpack.c.l.b16 %v206
        %v239 = vunpack.c.l.b16 %v207
        %v240 = vunpack.c.l.b16 %v208
        %v241 = vunpack.c.l.b16 %v209
        %v242 = vpack.c.b16 %v235, %v234
        %v243 = vpack.c.b16 %v237, %v236
        %v244 = vpack.c.b16 %v239, %v238
        %v245 = vpack.c.b16 %v241, %v240
        %v266 = vunpack.c.l.b16 %v210
        %v267 = vunpack.c.l.b16 %v211
        %v268 = vunpack.c.l.b16 %v212
        %v269 = vunpack.c.l.b16 %v213
        %v270 = vunpack.c.l.b16 %v214
        %v271 = vunpack.c.l.b16 %v215
        %v272 = vunpack.c.l.b16 %v216
        %v273 = vunpack.c.l.b16 %v217
        %v274 = vunpack.c.l.b16 %v218
        %v275 = vunpack.c.l.b16 %v219
        %v276 = vunpack.c.l.b16 %v220
        %v277 = vunpack.c.l.b16 %v221
        %v278 = vunpack.c.l.b16 %v222
        %v279 = vunpack.c.l.b16 %v223
        %v280 = vunpack.c.l.b16 %v224
        %v281 = vunpack.c.l.b16 %v225
        %v282 = vpack.c.b16 %v267, %v266
        %v283 = vpack.c.b16 %v269, %v268
        %v284 = vpack.c.b16 %v271, %v270
        %v285 = vpack.c.b16 %v273, %v272
        %v286 = vpack.c.b16 %v275, %v274
        %v287 = vpack.c.b16 %v277, %v276
        %v288 = vpack.c.b16 %v279, %v278
        %v289 = vpack.c.b16 %v281, %v280
        %298 = vmatpush.bf16.msra.mxu0 %v289
        %299 = vmatpush.bf16.msra.mxu0 %v288
        %300 = vmatpush.bf16.msra.mxu0 %v287
        %301 = vmatpush.bf16.msra.mxu0 %v286
        %302 = vmatpush.bf16.msra.mxu0 %v285
        %303 = vmatpush.bf16.msra.mxu0 %v284
        %304 = vmatpush.bf16.msra.mxu0 %v283
        %305 = vmatpush.bf16.msra.mxu0 %v282
        %306 = vmatmul.bf16.gmra.mxu0 %v242
        %v307 = vpop.f32.mrf.mxu0
        %v308 = vadd.f32 0.0, %v307
        %v309 = vpop.f32.mrf.mxu0
        %v310 = vadd.f32 0.0, %v309
        %311 = vmatmul.bf16.gmra.mxu0 %v243
        %v312 = vpop.f32.mrf.mxu0
        %v313 = vadd.f32 0.0, %v312
        %v314 = vpop.f32.mrf.mxu0
        %v315 = vadd.f32 0.0, %v314
        %316 = vmatmul.bf16.gmra.mxu0 %v244
        %v317 = vpop.f32.mrf.mxu0
        %v318 = vadd.f32 0.0, %v317
        %v319 = vpop.f32.mrf.mxu0
        %v320 = vadd.f32 0.0, %v319
        %321 = vmatmul.bf16.gmra.mxu0 %v245
        %v322 = vpop.f32.mrf.mxu0
        %v323 = vadd.f32 0.0, %v322
        %v324 = vpop.f32.mrf.mxu0
        %v325 = vadd.f32 0.0, %v324
        %326 = vdwg.mxu0
        %327 = vst [vmem:[#allocation2] sm:$0xff] %v308
        %328 = vst [vmem:[#allocation2 + $0x8] sm:$0xff] %v310
        %329 = vst [vmem:[#allocation2 + $0x10] sm:$0xff] %v313
        %330 = vst [vmem:[#allocation2 + $0x18] sm:$0xff] %v315
        %331 = vst [vmem:[#allocation2 + $0x20] sm:$0xff] %v318
        %332 = vst [vmem:[#allocation2 + $0x28] sm:$0xff] %v320
        %333 = vst [vmem:[#allocation2 + $0x30] sm:$0xff] %v323
        %334 = vst [vmem:[#allocation2 + $0x38] sm:$0xff] %v325
        %s335 = scalar_lea.vmem %s175, 4 [#allocation3]
        %v336 = vld [vmem:[%s335] sm:$0xf]
        %v337 = vld [vmem:[%s335 + $0x4] sm:$0xf]
        %v338 = vld [vmem:[%s335 + $0x8] sm:$0xf]
        %v339 = vld [vmem:[%s335 + $0xc] sm:$0xf]
        %v340 = vld [vmem:[%s335 + $0x10] sm:$0xf]
        %v341 = vld [vmem:[%s335 + $0x14] sm:$0xf]
        %v342 = vld [vmem:[%s335 + $0x18] sm:$0xf]
        %v343 = vld [vmem:[%s335 + $0x1c] sm:$0xf]
        %v344 = vld [vmem:[#allocation2] sm:$0xff]
        %v345 = vld [vmem:[#allocation2 + $0x8] sm:$0xff]
        %v346 = vld [vmem:[#allocation2 + $0x10] sm:$0xff]
        %v347 = vld [vmem:[#allocation2 + $0x18] sm:$0xff]
        %v348 = vld [vmem:[#allocation2 + $0x20] sm:$0xff]
        %v349 = vld [vmem:[#allocation2 + $0x28] sm:$0xff]
        %v350 = vld [vmem:[#allocation2 + $0x30] sm:$0xff]
        %v351 = vld [vmem:[#allocation2 + $0x38] sm:$0xff]
        %s352 = scalar_lea.vmem [#allocation6], 64
        %v353 = vld [vmem:[%s352] sm:$0xf]
        %v354 = vld [vmem:[%s352 + $0x4] sm:$0xf]
        %v355 = vld [vmem:[%s352 + $0x8] sm:$0xf]
        %v356 = vld [vmem:[%s352 + $0xc] sm:$0xf]
        %v357 = vld [vmem:[%s352 + $0x10] sm:$0xf]
        %v358 = vld [vmem:[%s352 + $0x14] sm:$0xf]
        %v359 = vld [vmem:[%s352 + $0x18] sm:$0xf]
        %v360 = vld [vmem:[%s352 + $0x1c] sm:$0xf]
        %v361 = vld [vmem:[%s352 + $0x20] sm:$0xf]
        %v362 = vld [vmem:[%s352 + $0x24] sm:$0xf]
        %v363 = vld [vmem:[%s352 + $0x28] sm:$0xf]
        %v364 = vld [vmem:[%s352 + $0x2c] sm:$0xf]
        %v365 = vld [vmem:[%s352 + $0x30] sm:$0xf]
        %v366 = vld [vmem:[%s352 + $0x34] sm:$0xf]
        %v367 = vld [vmem:[%s352 + $0x38] sm:$0xf]
        %v368 = vld [vmem:[%s352 + $0x3c] sm:$0xf]
        %v377 = vunpack.c.l.b16 %v336
        %v378 = vunpack.c.l.b16 %v337
        %v379 = vunpack.c.l.b16 %v338
        %v380 = vunpack.c.l.b16 %v339
        %v381 = vunpack.c.l.b16 %v340
        %v382 = vunpack.c.l.b16 %v341
        %v383 = vunpack.c.l.b16 %v342
        %v384 = vunpack.c.l.b16 %v343
        %v385 = vpack.c.b16 %v378, %v377
        %v386 = vpack.c.b16 %v380, %v379
        %v387 = vpack.c.b16 %v382, %v381
        %v388 = vpack.c.b16 %v384, %v383
        %v409 = vunpack.c.l.b16 %v353
        %v410 = vunpack.c.l.b16 %v354
        %v411 = vunpack.c.l.b16 %v355
        %v412 = vunpack.c.l.b16 %v356
        %v413 = vunpack.c.l.b16 %v357
        %v414 = vunpack.c.l.b16 %v358
        %v415 = vunpack.c.l.b16 %v359
        %v416 = vunpack.c.l.b16 %v360
        %v417 = vunpack.c.l.b16 %v361
        %v418 = vunpack.c.l.b16 %v362
        %v419 = vunpack.c.l.b16 %v363
        %v420 = vunpack.c.l.b16 %v364
        %v421 = vunpack.c.l.b16 %v365
        %v422 = vunpack.c.l.b16 %v366
        %v423 = vunpack.c.l.b16 %v367
        %v424 = vunpack.c.l.b16 %v368
        %v425 = vpack.c.b16 %v410, %v409
        %v426 = vpack.c.b16 %v412, %v411
        %v427 = vpack.c.b16 %v414, %v413
        %v428 = vpack.c.b16 %v416, %v415
        %v429 = vpack.c.b16 %v418, %v417
        %v430 = vpack.c.b16 %v420, %v419
        %v431 = vpack.c.b16 %v422, %v421
        %v432 = vpack.c.b16 %v424, %v423
        %441 = vmatpush.bf16.msra.mxu0 %v432
        %442 = vmatpush.bf16.msra.mxu0 %v431
        %443 = vmatpush.bf16.msra.mxu0 %v430
        %444 = vmatpush.bf16.msra.mxu0 %v429
        %445 = vmatpush.bf16.msra.mxu0 %v428
        %446 = vmatpush.bf16.msra.mxu0 %v427
        %447 = vmatpush.bf16.msra.mxu0 %v426
        %448 = vmatpush.bf16.msra.mxu0 %v425
        %449 = vmatmul.bf16.gmra.mxu0 %v385
        %v450 = vpop.f32.mrf.mxu0
        %v451 = vadd.f32 0.0, %v450
        %v452 = vpop.f32.mrf.mxu0
        %v453 = vadd.f32 0.0, %v452
        %454 = vmatmul.bf16.gmra.mxu0 %v386
        %v455 = vpop.f32.mrf.mxu0
        %v456 = vadd.f32 0.0, %v455
        %v457 = vpop.f32.mrf.mxu0
        %v458 = vadd.f32 0.0, %v457
        %459 = vmatmul.bf16.gmra.mxu0 %v387
        %v460 = vpop.f32.mrf.mxu0
        %v461 = vadd.f32 0.0, %v460
        %v462 = vpop.f32.mrf.mxu0
        %v463 = vadd.f32 0.0, %v462
        %464 = vmatmul.bf16.gmra.mxu0 %v388
        %v465 = vpop.f32.mrf.mxu0
        %v466 = vadd.f32 0.0, %v465
        %v467 = vpop.f32.mrf.mxu0
        %v468 = vadd.f32 0.0, %v467
        %469 = vdwg.mxu0
        %v470 = vadd.f32 %v344, %v451
        %v471 = vadd.f32 %v345, %v453
        %v472 = vadd.f32 %v346, %v456
        %v473 = vadd.f32 %v347, %v458
        %v474 = vadd.f32 %v348, %v461
        %v475 = vadd.f32 %v349, %v463
        %v476 = vadd.f32 %v350, %v466
        %v477 = vadd.f32 %v351, %v468
        %478 = vst [vmem:[#allocation2] sm:$0xff] %v470
        %479 = vst [vmem:[#allocation2 + $0x8] sm:$0xff] %v471
        %480 = vst [vmem:[#allocation2 + $0x10] sm:$0xff] %v472
        %481 = vst [vmem:[#allocation2 + $0x18] sm:$0xff] %v473
        %482 = vst [vmem:[#allocation2 + $0x20] sm:$0xff] %v474
        %483 = vst [vmem:[#allocation2 + $0x28] sm:$0xff] %v475
        %484 = vst [vmem:[#allocation2 + $0x30] sm:$0xff] %v476
        %485 = vst [vmem:[#allocation2 + $0x38] sm:$0xff] %v477
        %v486 = vld [vmem:[#allocation2] sm:$0xff]
        %v487 = vld [vmem:[#allocation2 + $0x8] sm:$0xff]
        %v488 = vld [vmem:[#allocation2 + $0x10] sm:$0xff]
        %v489 = vld [vmem:[#allocation2 + $0x18] sm:$0xff]
        %v490 = vld [vmem:[#allocation2 + $0x20] sm:$0xff]
        %v491 = vld [vmem:[#allocation2 + $0x28] sm:$0xff]
        %v492 = vld [vmem:[#allocation2 + $0x30] sm:$0xff]
        %v493 = vld [vmem:[#allocation2 + $0x38] sm:$0xff]
        %v494 = vadd.f32 %v486, %v487
        %v495 = vadd.f32 %v494, %v488
        %v496 = vadd.f32 %v495, %v489
        %v497 = vadd.f32 %v496, %v490
        %v498 = vadd.f32 %v497, %v491
        %v499 = vadd.f32 %v498, %v492
        %v500 = vadd.f32 %v499, %v493
        %v501 = vrot.slane %v500, 4
        %v502 = vadd.f32 %v500, %v501
        %v503 = vrot.slane %v502, 2
        %v504 = vadd.f32 %v502, %v503
        %v505 = vrot.slane %v504, 1
        %v506 = vadd.f32 %v504, %v505
        %v507 = vmul.f32 %v506, 0.015625
        %v508 = vmul.f32 %v486, %v486
        %v509 = vmul.f32 %v487, %v487
        %v510 = vmul.f32 %v488, %v488
        %v511 = vmul.f32 %v489, %v489
        %v512 = vmul.f32 %v490, %v490
        %v513 = vmul.f32 %v491, %v491
        %v514 = vmul.f32 %v492, %v492
        %v515 = vmul.f32 %v493, %v493
        %v516 = vadd.f32 %v508, %v509
        %v517 = vadd.f32 %v516, %v510
        %v518 = vadd.f32 %v517, %v511
        %v519 = vadd.f32 %v518, %v512
        %v520 = vadd.f32 %v519, %v513
        %v521 = vadd.f32 %v520, %v514
        %v522 = vadd.f32 %v521, %v515
        %v523 = vrot.slane %v522, 4
        %v524 = vadd.f32 %v522, %v523
        %v525 = vrot.slane %v524, 2
        %v526 = vadd.f32 %v524, %v525
        %v527 = vrot.slane %v526, 1
        %v528 = vadd.f32 %v526, %v527
        %v529 = vmul.f32 %v528, 0.015625
        %v530 = vmul.f32 %v507, %v507
        %v531 = vsub.f32 %v529, %v530
        %v532 = vmax.f32 %v531, 0.0
        %v533 = vadd.f32 %v532, 1e-05
        %v534 = vrsqrt.pop %v533
        %v535 = vmul.f32 %v534, %v533
        %v536 = vmul.f32 %v535, %v534
        %v537 = vmul.f32 0.5, %v536
        %v538 = vsub.f32 1.5, %v537
        %v539 = vmul.f32 %v534, %v538
        %vm540 = vweird.f32 %v533
        %vm541 = vweird.f32 %v534
        %vm542 = vmor %vm540, %vm541
        %v543 = vsel %vm542, %v534, %v539
        %v544 = vsub.f32 %v486, %v507
        %v545 = vsub.f32 %v487, %v507
        %v546 = vsub.f32 %v488, %v507
        %v547 = vsub.f32 %v489, %v507
        %v548 = vsub.f32 %v490, %v507
        %v549 = vsub.f32 %v491, %v507
        %v550 = vsub.f32 %v492, %v507
        %v551 = vsub.f32 %v493, %v507
        %v552 = vmul.f32 %v544, %v543
        %v553 = vmul.f32 %v545, %v543
        %v554 = vmul.f32 %v546, %v543
        %v555 = vmul.f32 %v547, %v543
        %v556 = vmul.f32 %v548, %v543
        %v557 = vmul.f32 %v549, %v543
        %v558 = vmul.f32 %v550, %v543
        %v559 = vmul.f32 %v551, %v543
        %v560 = vmax.f32 %v552, 0.0
        %v561 = vmax.f32 %v553, 0.0
        %v562 = vmax.f32 %v554, 0.0
        %v563 = vmax.f32 %v555, 0.0
        %v564 = vmax.f32 %v556, 0.0
        %v565 = vmax.f32 %v557, 0.0
        %v566 = vmax.f32 %v558, 0.0
        %v567 = vmax.f32 %v559, 0.0
        %v568 = vpack.c.bf16 %v560, %v560
        %v569 = vpack.c.bf16 %v561, %v561
        %v570 = vpack.c.bf16 %v562, %v562
        %v571 = vpack.c.bf16 %v563, %v563
        %v572 = vpack.c.bf16 %v564, %v564
        %v573 = vpack.c.bf16 %v565, %v565
        %v574 = vpack.c.bf16 %v566, %v566
        %v575 = vpack.c.bf16 %v567, %v567
        %576 = vst [vmem:[%s201] sm:$0xf] %v568
        %577 = vst [vmem:[%s201 + $0x4] sm:$0xf] %v569
        %578 = vst [vmem:[%s201 + $0x8] sm:$0xf] %v570
        %579 = vst [vmem:[%s201 + $0xc] sm:$0xf] %v571
        %580 = vst [vmem:[%s201 + $0x10] sm:$0xf] %v572
        %581 = vst [vmem:[%s201 + $0x14] sm:$0xf] %v573
        %582 = vst [vmem:[%s201 + $0x18] sm:$0xf] %v574
        %583 = vst [vmem:[%s201 + $0x1c] sm:$0xf] %v575
        %s584 = sand.u32 %s94, 1
        %s585 = scalar_lea.sflag [#allocation5], %s584
        %s586 = sand.u32 %s94, 1
        %s587 = smul.addr %s586, 32
        %s588 = scalar_lea.vmem [#allocation8], %s587
        // Predicated region
        $region37: #{tpu_custom_call.1} parent=27 // pred_check
          %p589 = pneg %p104
        $region38: #{tpu_custom_call.1} parent=27 // pred_check_branch
          %591 = sbr.rel (%p589) target = $region40
        $region39: #{tpu_custom_call.1} parent=27 // pred_region
          %593 = vsyncadd %s585, 0
          %s594 = smul.addr %s24, 8
          %s595 = sadd.s32 %s25, %s594
          %s596 = smul.addr %s595, 4
          %s597 = scalar_lea.hbm %s2, %s596
          %s598 = sshll.u32 %s588, 4
          %s599 = int_to_ptr.vmem [resolvable:$true] %s598
          %s600 = sshll.u32 %s597, 4
          %s601 = int_to_ptr.hbm [resolvable:$true] %s600
          %606 = dma.vmem_to_hbm [thread:$0]  %s599, 512, %s601, %s585, 64, 64, 4
        $region40: #{tpu_custom_call.1} parent=27 // pred_fallthru
          _
      $region28: #{tpu_custom_call.1} parent=5 // pred_fallthru
        _
      %p607 = scmp.le.s32.totalorder 2, %s15
      // Predicated region
      $region41: #{tpu_custom_call.1} parent=5 // pred_check
        %p608 = pneg %p607
      $region42: #{tpu_custom_call.1} parent=5 // pred_check_branch
        %610 = sbr.rel (%p608) target = $region44
      $region43: #{tpu_custom_call.1} parent=5 // pred_region
        %s611 = ssub.s32 %s15, 2
        // Predicated region
        $region45: #{tpu_custom_call.1} parent=43 // pred_check
          %p612 = pneg %p110
        $region46: #{tpu_custom_call.1} parent=43 // pred_check_branch
          %614 = sbr.rel (%p612) target = $region48
        $region47: #{tpu_custom_call.1} parent=43 // pred_region
          %s615 = sand.u32 %s95, 1
          %s616 = scalar_lea.sflag [#allocation5], %s615
          %s617 = sand.u32 %s95, 1
          %s618 = smul.addr %s617, 32
          %s619 = scalar_lea.vmem [#allocation8], %s618
          %621 = dma.done %s616, 512
        $region48: #{tpu_custom_call.1} parent=43 // pred_fallthru
          _
      $region44: #{tpu_custom_call.1} parent=5 // pred_fallthru
        _
    $region6: #{tpu_custom_call.1} parent=1 // loop_footer
      %s19 = sadd.s32 1, %s15
    $region7: #{tpu_custom_call.1} parent=1 // loop_footer_branch
      %14 = sbr.rel target = $region3
    $region8: #{tpu_custom_call.1} parent=1 // loop_exit
      _
    %622 = vsyncpa [#allocation4], 1
    %s623 = scalar_lea.sflag [#allocation4], 1
    %624 = vsyncpa %s623, 1
    %625 = vsyncpa [#allocation7], 1
    %626 = vsyncpa [#allocation5], 1
    %s627 = scalar_lea.sflag [#allocation5], 1
    %628 = vsyncpa %s627, 1

// kernel: tpu_custom_call.1
$region0: #{tpu_custom_call.1}
  #allocation0 [shape = 'u32[]', space=smem, size = 0x4, offset = 0x4, fixed_abs, tag = 'smem constant byte address 0x4 - core index']
  #allocation1 [shape = 'u32[72,128]{1,0:T(1,128)}', space=vmem, size = 0x9000, scoped, tag = 'internal scratch']
  #allocation2 [shape = 'f32[64,128]{1,0:T(8,128)}', space=vmem, size = 0x8000, scoped, tag = 'scratch operand']
  %s0 = inlined_call_operand.hbm [shape: bf16[2,9,8,128], index: 0, kind: input, shape index: {}]
  %s1 = inlined_call_operand.hbm [shape: bf16[2,128,128], index: 1, kind: input, shape index: {}]
  %s2 = inlined_call_operand.hbm [shape: bf16[2,64,128], index: 2, kind: output, shape index: {}]
  %s3 = sld [smem:[#allocation0]]
  $region49: #{tpu_custom_call.1} parent=0
    _
  %s5 = ssub.s32 1, %s3
  %s6 = scalar_select 0, %s5, %s3
  $region1: #{tpu_custom_call.1} parent=0
    #allocation3 [shape = 'u8[36864]{0}', space=vmem, size = 0x9000, scoped, tag = 'input window, operand 0']
    #allocation4 [shape = 's32[2]{0}', space=sflag, size = 0x8, scoped, tag = 'scoped memory for tpu_custom_call.1']
    #allocation5 [shape = 's32[2]{0}', space=sflag, size = 0x8, scoped, tag = 'scoped memory for tpu_custom_call.1']
    #allocation6 [shape = 'u8[65536]{0}', space=vmem, size = 0x10000, scoped, tag = 'input window, operand 1, single buffered']
    #allocation7 [shape = 's32[1]{0}', space=sflag, size = 0x4, scoped, tag = 'scoped memory for tpu_custom_call.1']
    #allocation8 [shape = 'u8[32768]{0}', space=vmem, size = 0x8000, scoped, tag = 'output window, operand 0']
    %7 = vsyncpa [#allocation4], 0
    %s8 = scalar_lea.sflag [#allocation4], 1
    %9 = vsyncpa %s8, 0
    %10 = vsyncpa [#allocation7], 0
    %11 = vsyncpa [#allocation5], 0
    %s12 = scalar_lea.sflag [#allocation5], 1
    %13 = vsyncpa %s12, 0
    loop: start=0, step=1, limit=4
    $region2: #{tpu_custom_call.1} parent=1 // loop_pre_header
      _
    $region3: #{tpu_custom_call.1} parent=1 // loop_header
      %s15 = sphi 0, %s19
      %p16 = scmp.ge.s32.totalorder %s15, 4
      %s22 = sphi 0, %s34
      %s23 = sphi 0, %s30
      %s24 = sphi 0, %s22
      %s25 = sphi 0, %s23
      %s26 = sphi 0, %s24
      %s27 = sphi 0, %s25
      %s37 = sphi 0, %s39
      %s40 = sphi 0, %s37
      %s41 = sphi 0, %s40
      %s57 = sphi 0, %s41
      %s63 = sphi 0, %s65
      %s66 = sphi 0, %s63
      %s67 = sphi 0, %s66
      %s83 = sphi 0, %s67
      %s91 = sphi 0, %s93
      %s94 = sphi 0, %s91
      %s95 = sphi 0, %s94
      %s111 = sphi 0, %s95
    $region4: #{tpu_custom_call.1} parent=1 // loop_header_branch
      %18 = sbr.rel (%p16) target = $region8
    $region5: #{tpu_custom_call.1} parent=1 // loop_body
      %s20 = ssub.s32 %s15, 1
      %s21 = ssub.s32 %s15, 2
      %s28 = sadd.s32 1, %s23
      %p29 = scmp.ge.s32.totalorder %s28, 1
      %s30 = scalar_select %p29, 0, %s28
      %s31 = sadd.s32 1, %s22
      %s32 = scalar_select %p29, %s31, %s22
      %p33 = scmp.ge.s32.totalorder %s32, 2
      %s34 = scalar_select %p33, 0, %s32
      %s35 = ssub.s32 %s22, %s34
      %p36 = scmp.eq.s32.totalorder %s35, 0
      %s38 = sadd.s32 %s37, 1
      %s39 = scalar_select %p36, %s37, %s38
      %p42 = pneg %p36
      %p43 = scmp.eq.s32.totalorder %s15, 1
      %p44 = por %p42, %p43
      %p45 = scmp.ne.s32.totalorder %s37, %s40
      %p46 = scmp.eq.s32.totalorder %s15, 0
      %p47 = por %p45, %p46
      %p48 = scmp.ne.s32.totalorder %s37, %s40
      %p49 = scmp.eq.s32.totalorder %s20, 1
      %p50 = por %p48, %p49
      %p51 = scmp.ne.s32.totalorder %s40, %s41
      %p52 = scmp.eq.s32.totalorder %s20, 0
      %p53 = por %p51, %p52
      %p54 = scmp.ne.s32.totalorder %s40, %s41
      %p55 = scmp.eq.s32.totalorder %s21, 1
      %p56 = por %p54, %p55
      %p58 = scmp.ne.s32.totalorder %s41, %s57
      %p59 = scmp.eq.s32.totalorder %s21, 0
      %p60 = por %p58, %p59
      %s61 = ssub.s32 %s23, %s30
      %p62 = scmp.eq.s32.totalorder %s61, 0
      %s64 = sadd.s32 %s63, 1
      %s65 = scalar_select %p62, %s63, %s64
      %p68 = pneg %p62
      %p69 = scmp.eq.s32.totalorder %s15, 1
      %p70 = por %p68, %p69
      %p71 = scmp.ne.s32.totalorder %s63, %s66
      %p72 = scmp.eq.s32.totalorder %s15, 0
      %p73 = por %p71, %p72
      %p74 = scmp.ne.s32.totalorder %s63, %s66
      %p75 = scmp.eq.s32.totalorder %s20, 1
      %p76 = por %p74, %p75
      %p77 = scmp.ne.s32.totalorder %s66, %s67
      %p78 = scmp.eq.s32.totalorder %s20, 0
      %p79 = por %p77, %p78
      %p80 = scmp.ne.s32.totalorder %s66, %s67
      %p81 = scmp.eq.s32.totalorder %s21, 1
      %p82 = por %p80, %p81
      %p84 = scmp.ne.s32.totalorder %s67, %s83
      %p85 = scmp.eq.s32.totalorder %s21, 0
      %p86 = por %p84, %p85
      %s87 = ssub.s32 %s22, %s34
      %s88 = ssub.s32 %s23, %s30
      %s89 = sor.u32 %s87, %s88
      %p90 = scmp.eq.s32.totalorder %s89, 0
      %s92 = sadd.s32 %s91, 1
      %s93 = scalar_select %p90, %s91, %s92
      %p96 = pneg %p90
      %p97 = scmp.eq.s32.totalorder %s15, 1
      %p98 = por %p96, %p97
      %p99 = scmp.ne.s32.totalorder %s91, %s94
      %p100 = scmp.eq.s32.totalorder %s15, 0
      %p101 = por %p99, %p100
      %p102 = scmp.ne.s32.totalorder %s91, %s94
      %p103 = scmp.eq.s32.totalorder %s20, 1
      %p104 = por %p102, %p103
      %p105 = scmp.ne.s32.totalorder %s94, %s95
      %p106 = scmp.eq.s32.totalorder %s20, 0
      %p107 = por %p105, %p106
      %p108 = scmp.ne.s32.totalorder %s94, %s95
      %p109 = scmp.eq.s32.totalorder %s21, 1
      %p110 = por %p108, %p109
      %p112 = scmp.ne.s32.totalorder %s95, %s111
      %p113 = scmp.eq.s32.totalorder %s21, 0
      %p114 = por %p112, %p113
      %p115 = scmp.le.s32.totalorder 1, %s15
      %p116 = scmp.lt.s32.totalorder %s15, 3
      %p117 = pnand %p115, %p116
      %p118 = pneg %p117
      // Predicated region
      $region9: #{tpu_custom_call.1} parent=5 // pred_check
        _
      $region10: #{tpu_custom_call.1} parent=5 // pred_check_branch
        %120 = sbr.rel (%p117) target = $region12
      $region11: #{tpu_custom_call.1} parent=5 // pred_region
        %s121 = ssub.s32 %s15, 1
        // Predicated region
        $region13: #{tpu_custom_call.1} parent=11 // pred_check
          %p122 = pneg %p79
        $region14: #{tpu_custom_call.1} parent=11 // pred_check_branch
          %124 = sbr.rel (%p122) target = $region16
        $region15: #{tpu_custom_call.1} parent=11 // pred_region
          %126 = vsyncadd [#allocation7], 0
          %s127 = smul.addr %s25, 4
          %s128 = scalar_lea.hbm %s1, %s127
          %s129 = sshll.u32 %s128, 4
          %s130 = int_to_ptr.hbm [resolvable:$true] %s129
          %s131 = sshll.u32 [#allocation6], 4
          %s132 = int_to_ptr.vmem [resolvable:$true] %s131
          %137 = dma.hbm_to_vmem [thread:$0]  %s130, 2048, %s132, [#allocation7], 64, 64, 4
        $region16: #{tpu_custom_call.1} parent=11 // pred_fallthru
          _
      $region12: #{tpu_custom_call.1} parent=5 // pred_fallthru
        _
      %p138 = scmp.lt.s32.totalorder %s15, 2
      // Predicated region
      $region17: #{tpu_custom_call.1} parent=5 // pred_check
        %p139 = pneg %p138
      $region18: #{tpu_custom_call.1} parent=5 // pred_check_branch
        %141 = sbr.rel (%p139) target = $region20
      $region19: #{tpu_custom_call.1} parent=5 // pred_region
        // Predicated region
        $region21: #{tpu_custom_call.1} parent=19 // pred_check
          %p142 = pneg %p47
        $region22: #{tpu_custom_call.1} parent=19 // pred_check_branch
          %144 = sbr.rel (%p142) target = $region24
        $region23: #{tpu_custom_call.1} parent=19 // pred_region
          %s145 = sand.u32 %s37, 1
          %s146 = scalar_lea.sflag [#allocation4], %s145
          %s147 = sand.u32 %s37, 1
          %s148 = smul.addr %s147, 36
          %s149 = scalar_lea.vmem [#allocation3], %s148
          %151 = vsyncadd %s146, 0
          %s152 = smul.addr %s22, 9
          %s153 = smul.addr %s152, 4
          %s154 = scalar_lea.hbm %s0, %s153
          %s155 = sshll.u32 %s154, 4
          %s156 = int_to_ptr.hbm [resolvable:$true] %s155
          %s157 = sshll.u32 %s149, 4
          %s158 = int_to_ptr.vmem [resolvable:$true] %s157
          %163 = dma.hbm_to_vmem [thread:$0]  %s156, 576, %s158, %s146, 64, 64, 4
        $region24: #{tpu_custom_call.1} parent=19 // pred_fallthru
          _
      $region20: #{tpu_custom_call.1} parent=5 // pred_fallthru
        _
      %p164 = scmp.le.s32.totalorder 1, %s15
      %p165 = scmp.lt.s32.totalorder %s15, 3
      %p166 = pnand %p164, %p165
      %p167 = pneg %p166
      // Predicated region
      $region25: #{tpu_custom_call.1} parent=5 // pred_check
        _
      $region26: #{tpu_custom_call.1} parent=5 // pred_check_branch
        %169 = sbr.rel (%p166) target = $region28
      $region27: #{tpu_custom_call.1} parent=5 // pred_region
        %s170 = ssub.s32 %s15, 1
        %s171 = sand.u32 %s40, 1
        %s172 = scalar_lea.sflag [#allocation4], %s171
        %s173 = sand.u32 %s40, 1
        %s174 = smul.addr %s173, 36
        %s175 = scalar_lea.vmem [#allocation3], %s174
        // Predicated region
        $region29: #{tpu_custom_call.1} parent=27 // pred_check
          %p176 = pneg %p53
        $region30: #{tpu_custom_call.1} parent=27 // pred_check_branch
          %178 = sbr.rel (%p176) target = $region32
        $region31: #{tpu_custom_call.1} parent=27 // pred_region
          %180 = dma.done %s172, 576
        $region32: #{tpu_custom_call.1} parent=27 // pred_fallthru
          _
        // Predicated region
        $region33: #{tpu_custom_call.1} parent=27 // pred_check
          %p181 = pneg %p79
        $region34: #{tpu_custom_call.1} parent=27 // pred_check_branch
          %183 = sbr.rel (%p181) target = $region36
        $region35: #{tpu_custom_call.1} parent=27 // pred_region
          %185 = dma.done [#allocation7], 2048
        $region36: #{tpu_custom_call.1} parent=27 // pred_fallthru
          _
        %s186 = sand.u32 %s40, 1
        %s187 = scalar_lea.sflag [#allocation4], %s186
        %s188 = sand.u32 %s40, 1
        %s189 = smul.addr %s188, 36
        %s190 = scalar_lea.vmem [#allocation3], %s189
        %p191 = pneg %p53
        %p192 = pneg %p50
        %p193 = pneg %p79
        %p194 = pneg %p76
        %p195 = pneg %p107
        %p196 = pneg %p104
        %s197 = sand.u32 %s94, 1
        %s198 = scalar_lea.sflag [#allocation5], %s197
        %s199 = sand.u32 %s94, 1
        %s200 = smul.addr %s199, 32
        %s201 = scalar_lea.vmem [#allocation8], %s200
        %v202 = vld [vmem:[%s175] sm:$0xf]
        %v203 = vld [vmem:[%s175 + $0x4] sm:$0xf]
        %v204 = vld [vmem:[%s175 + $0x8] sm:$0xf]
        %v205 = vld [vmem:[%s175 + $0xc] sm:$0xf]
        %v206 = vld [vmem:[%s175 + $0x10] sm:$0xf]
        %v207 = vld [vmem:[%s175 + $0x14] sm:$0xf]
        %v208 = vld [vmem:[%s175 + $0x18] sm:$0xf]
        %v209 = vld [vmem:[%s175 + $0x1c] sm:$0xf]
        %v210 = vld [vmem:[#allocation6] sm:$0xf]
        %v211 = vld [vmem:[#allocation6 + $0x4] sm:$0xf]
        %v212 = vld [vmem:[#allocation6 + $0x8] sm:$0xf]
        %v213 = vld [vmem:[#allocation6 + $0xc] sm:$0xf]
        %v214 = vld [vmem:[#allocation6 + $0x10] sm:$0xf]
        %v215 = vld [vmem:[#allocation6 + $0x14] sm:$0xf]
        %v216 = vld [vmem:[#allocation6 + $0x18] sm:$0xf]
        %v217 = vld [vmem:[#allocation6 + $0x1c] sm:$0xf]
        %v218 = vld [vmem:[#allocation6 + $0x20] sm:$0xf]
        %v219 = vld [vmem:[#allocation6 + $0x24] sm:$0xf]
        %v220 = vld [vmem:[#allocation6 + $0x28] sm:$0xf]
        %v221 = vld [vmem:[#allocation6 + $0x2c] sm:$0xf]
        %v222 = vld [vmem:[#allocation6 + $0x30] sm:$0xf]
        %v223 = vld [vmem:[#allocation6 + $0x34] sm:$0xf]
        %v224 = vld [vmem:[#allocation6 + $0x38] sm:$0xf]
        %v225 = vld [vmem:[#allocation6 + $0x3c] sm:$0xf]
        %v234 = vunpack.c.l.b16 %v202
        %v235 = vunpack.c.l.b16 %v203
        %v236 = vunpack.c.l.b16 %v204
        %v237 = vunpack.c.l.b16 %v205
        %v238 = vunpack.c.l.b16 %v206
        %v239 = vunpack.c.l.b16 %v207
        %v240 = vunpack.c.l.b16 %v208
        %v241 = vunpack.c.l.b16 %v209
        %v242 = vpack.c.b16 %v235, %v234
        %v243 = vpack.c.b16 %v237, %v236
        %v244 = vpack.c.b16 %v239, %v238
        %v245 = vpack.c.b16 %v241, %v240
        %v266 = vunpack.c.l.b16 %v210
        %v267 = vunpack.c.l.b16 %v211
        %v268 = vunpack.c.l.b16 %v212
        %v269 = vunpack.c.l.b16 %v213
        %v270 = vunpack.c.l.b16 %v214
        %v271 = vunpack.c.l.b16 %v215
        %v272 = vunpack.c.l.b16 %v216
        %v273 = vunpack.c.l.b16 %v217
        %v274 = vunpack.c.l.b16 %v218
        %v275 = vunpack.c.l.b16 %v219
        %v276 = vunpack.c.l.b16 %v220
        %v277 = vunpack.c.l.b16 %v221
        %v278 = vunpack.c.l.b16 %v222
        %v279 = vunpack.c.l.b16 %v223
        %v280 = vunpack.c.l.b16 %v224
        %v281 = vunpack.c.l.b16 %v225
        %v282 = vpack.c.b16 %v267, %v266
        %v283 = vpack.c.b16 %v269, %v268
        %v284 = vpack.c.b16 %v271, %v270
        %v285 = vpack.c.b16 %v273, %v272
        %v286 = vpack.c.b16 %v275, %v274
        %v287 = vpack.c.b16 %v277, %v276
        %v288 = vpack.c.b16 %v279, %v278
        %v289 = vpack.c.b16 %v281, %v280
        %298 = vmatpush.bf16.msra.mxu0 %v289
        %299 = vmatpush.bf16.msra.mxu0 %v288
        %300 = vmatpush.bf16.msra.mxu0 %v287
        %301 = vmatpush.bf16.msra.mxu0 %v286
        %302 = vmatpush.bf16.msra.mxu0 %v285
        %303 = vmatpush.bf16.msra.mxu0 %v284
        %304 = vmatpush.bf16.msra.mxu0 %v283
        %305 = vmatpush.bf16.msra.mxu0 %v282
        %306 = vmatmul.bf16.gmra.mxu0 %v242
        %v307 = vpop.f32.mrf.mxu0
        %v308 = vadd.f32 0.0, %v307
        %v309 = vpop.f32.mrf.mxu0
        %v310 = vadd.f32 0.0, %v309
        %311 = vmatmul.bf16.gmra.mxu0 %v243
        %v312 = vpop.f32.mrf.mxu0
        %v313 = vadd.f32 0.0, %v312
        %v314 = vpop.f32.mrf.mxu0
        %v315 = vadd.f32 0.0, %v314
        %316 = vmatmul.bf16.gmra.mxu0 %v244
        %v317 = vpop.f32.mrf.mxu0
        %v318 = vadd.f32 0.0, %v317
        %v319 = vpop.f32.mrf.mxu0
        %v320 = vadd.f32 0.0, %v319
        %321 = vmatmul.bf16.gmra.mxu0 %v245
        %v322 = vpop.f32.mrf.mxu0
        %v323 = vadd.f32 0.0, %v322
        %v324 = vpop.f32.mrf.mxu0
        %v325 = vadd.f32 0.0, %v324
        %326 = vdwg.mxu0
        %327 = vst [vmem:[#allocation2] sm:$0xff] %v308
        %328 = vst [vmem:[#allocation2 + $0x8] sm:$0xff] %v310
        %329 = vst [vmem:[#allocation2 + $0x10] sm:$0xff] %v313
        %330 = vst [vmem:[#allocation2 + $0x18] sm:$0xff] %v315
        %331 = vst [vmem:[#allocation2 + $0x20] sm:$0xff] %v318
        %332 = vst [vmem:[#allocation2 + $0x28] sm:$0xff] %v320
        %333 = vst [vmem:[#allocation2 + $0x30] sm:$0xff] %v323
        %334 = vst [vmem:[#allocation2 + $0x38] sm:$0xff] %v325
        %s335 = scalar_lea.vmem %s175, 4 [#allocation3]
        %v336 = vld [vmem:[%s335] sm:$0xf]
        %v337 = vld [vmem:[%s335 + $0x4] sm:$0xf]
        %v338 = vld [vmem:[%s335 + $0x8] sm:$0xf]
        %v339 = vld [vmem:[%s335 + $0xc] sm:$0xf]
        %v340 = vld [vmem:[%s335 + $0x10] sm:$0xf]
        %v341 = vld [vmem:[%s335 + $0x14] sm:$0xf]
        %v342 = vld [vmem:[%s335 + $0x18] sm:$0xf]
        %v343 = vld [vmem:[%s335 + $0x1c] sm:$0xf]
        %v344 = vld [vmem:[#allocation2] sm:$0xff]
        %v345 = vld [vmem:[#allocation2 + $0x8] sm:$0xff]
        %v346 = vld [vmem:[#allocation2 + $0x10] sm:$0xff]
        %v347 = vld [vmem:[#allocation2 + $0x18] sm:$0xff]
        %v348 = vld [vmem:[#allocation2 + $0x20] sm:$0xff]
        %v349 = vld [vmem:[#allocation2 + $0x28] sm:$0xff]
        %v350 = vld [vmem:[#allocation2 + $0x30] sm:$0xff]
        %v351 = vld [vmem:[#allocation2 + $0x38] sm:$0xff]
        %s352 = scalar_lea.vmem [#allocation6], 64
        %v353 = vld [vmem:[%s352] sm:$0xf]
        %v354 = vld [vmem:[%s352 + $0x4] sm:$0xf]
        %v355 = vld [vmem:[%s352 + $0x8] sm:$0xf]
        %v356 = vld [vmem:[%s352 + $0xc] sm:$0xf]
        %v357 = vld [vmem:[%s352 + $0x10] sm:$0xf]
        %v358 = vld [vmem:[%s352 + $0x14] sm:$0xf]
        %v359 = vld [vmem:[%s352 + $0x18] sm:$0xf]
        %v360 = vld [vmem:[%s352 + $0x1c] sm:$0xf]
        %v361 = vld [vmem:[%s352 + $0x20] sm:$0xf]
        %v362 = vld [vmem:[%s352 + $0x24] sm:$0xf]
        %v363 = vld [vmem:[%s352 + $0x28] sm:$0xf]
        %v364 = vld [vmem:[%s352 + $0x2c] sm:$0xf]
        %v365 = vld [vmem:[%s352 + $0x30] sm:$0xf]
        %v366 = vld [vmem:[%s352 + $0x34] sm:$0xf]
        %v367 = vld [vmem:[%s352 + $0x38] sm:$0xf]
        %v368 = vld [vmem:[%s352 + $0x3c] sm:$0xf]
        %v377 = vunpack.c.l.b16 %v336
        %v378 = vunpack.c.l.b16 %v337
        %v379 = vunpack.c.l.b16 %v338
        %v380 = vunpack.c.l.b16 %v339
        %v381 = vunpack.c.l.b16 %v340
        %v382 = vunpack.c.l.b16 %v341
        %v383 = vunpack.c.l.b16 %v342
        %v384 = vunpack.c.l.b16 %v343
        %v385 = vpack.c.b16 %v378, %v377
        %v386 = vpack.c.b16 %v380, %v379
        %v387 = vpack.c.b16 %v382, %v381
        %v388 = vpack.c.b16 %v384, %v383
        %v409 = vunpack.c.l.b16 %v353
        %v410 = vunpack.c.l.b16 %v354
        %v411 = vunpack.c.l.b16 %v355
        %v412 = vunpack.c.l.b16 %v356
        %v413 = vunpack.c.l.b16 %v357
        %v414 = vunpack.c.l.b16 %v358
        %v415 = vunpack.c.l.b16 %v359
        %v416 = vunpack.c.l.b16 %v360
        %v417 = vunpack.c.l.b16 %v361
        %v418 = vunpack.c.l.b16 %v362
        %v419 = vunpack.c.l.b16 %v363
        %v420 = vunpack.c.l.b16 %v364
        %v421 = vunpack.c.l.b16 %v365
        %v422 = vunpack.c.l.b16 %v366
        %v423 = vunpack.c.l.b16 %v367
        %v424 = vunpack.c.l.b16 %v368
        %v425 = vpack.c.b16 %v410, %v409
        %v426 = vpack.c.b16 %v412, %v411
        %v427 = vpack.c.b16 %v414, %v413
        %v428 = vpack.c.b16 %v416, %v415
        %v429 = vpack.c.b16 %v418, %v417
        %v430 = vpack.c.b16 %v420, %v419
        %v431 = vpack.c.b16 %v422, %v421
        %v432 = vpack.c.b16 %v424, %v423
        %441 = vmatpush.bf16.msra.mxu0 %v432
        %442 = vmatpush.bf16.msra.mxu0 %v431
        %443 = vmatpush.bf16.msra.mxu0 %v430
        %444 = vmatpush.bf16.msra.mxu0 %v429
        %445 = vmatpush.bf16.msra.mxu0 %v428
        %446 = vmatpush.bf16.msra.mxu0 %v427
        %447 = vmatpush.bf16.msra.mxu0 %v426
        %448 = vmatpush.bf16.msra.mxu0 %v425
        %449 = vmatmul.bf16.gmra.mxu0 %v385
        %v450 = vpop.f32.mrf.mxu0
        %v451 = vadd.f32 0.0, %v450
        %v452 = vpop.f32.mrf.mxu0
        %v453 = vadd.f32 0.0, %v452
        %454 = vmatmul.bf16.gmra.mxu0 %v386
        %v455 = vpop.f32.mrf.mxu0
        %v456 = vadd.f32 0.0, %v455
        %v457 = vpop.f32.mrf.mxu0
        %v458 = vadd.f32 0.0, %v457
        %459 = vmatmul.bf16.gmra.mxu0 %v387
        %v460 = vpop.f32.mrf.mxu0
        %v461 = vadd.f32 0.0, %v460
        %v462 = vpop.f32.mrf.mxu0
        %v463 = vadd.f32 0.0, %v462
        %464 = vmatmul.bf16.gmra.mxu0 %v388
        %v465 = vpop.f32.mrf.mxu0
        %v466 = vadd.f32 0.0, %v465
        %v467 = vpop.f32.mrf.mxu0
        %v468 = vadd.f32 0.0, %v467
        %469 = vdwg.mxu0
        %v470 = vadd.f32 %v344, %v451
        %v471 = vadd.f32 %v345, %v453
        %v472 = vadd.f32 %v346, %v456
        %v473 = vadd.f32 %v347, %v458
        %v474 = vadd.f32 %v348, %v461
        %v475 = vadd.f32 %v349, %v463
        %v476 = vadd.f32 %v350, %v466
        %v477 = vadd.f32 %v351, %v468
        %478 = vst [vmem:[#allocation2] sm:$0xff] %v470
        %479 = vst [vmem:[#allocation2 + $0x8] sm:$0xff] %v471
        %480 = vst [vmem:[#allocation2 + $0x10] sm:$0xff] %v472
        %481 = vst [vmem:[#allocation2 + $0x18] sm:$0xff] %v473
        %482 = vst [vmem:[#allocation2 + $0x20] sm:$0xff] %v474
        %483 = vst [vmem:[#allocation2 + $0x28] sm:$0xff] %v475
        %484 = vst [vmem:[#allocation2 + $0x30] sm:$0xff] %v476
        %485 = vst [vmem:[#allocation2 + $0x38] sm:$0xff] %v477
        %v486 = vld [vmem:[#allocation2] sm:$0xff]
        %v487 = vld [vmem:[#allocation2 + $0x8] sm:$0xff]
        %v488 = vld [vmem:[#allocation2 + $0x10] sm:$0xff]
        %v489 = vld [vmem:[#allocation2 + $0x18] sm:$0xff]
        %v490 = vld [vmem:[#allocation2 + $0x20] sm:$0xff]
        %v491 = vld [vmem:[#allocation2 + $0x28] sm:$0xff]
        %v492 = vld [vmem:[#allocation2 + $0x30] sm:$0xff]
        %v493 = vld [vmem:[#allocation2 + $0x38] sm:$0xff]
        %v494 = vadd.f32 %v486, %v487
        %v495 = vadd.f32 %v494, %v488
        %v496 = vadd.f32 %v495, %v489
        %v497 = vadd.f32 %v496, %v490
        %v498 = vadd.f32 %v497, %v491
        %v499 = vadd.f32 %v498, %v492
        %v500 = vadd.f32 %v499, %v493
        %v501 = vrot.slane %v500, 4
        %v502 = vadd.f32 %v500, %v501
        %v503 = vrot.slane %v502, 2
        %v504 = vadd.f32 %v502, %v503
        %v505 = vrot.slane %v504, 1
        %v506 = vadd.f32 %v504, %v505
        %v507 = vmul.f32 %v506, 0.015625
        %v508 = vmul.f32 %v486, %v486
        %v509 = vmul.f32 %v487, %v487
        %v510 = vmul.f32 %v488, %v488
        %v511 = vmul.f32 %v489, %v489
        %v512 = vmul.f32 %v490, %v490
        %v513 = vmul.f32 %v491, %v491
        %v514 = vmul.f32 %v492, %v492
        %v515 = vmul.f32 %v493, %v493
        %v516 = vadd.f32 %v508, %v509
        %v517 = vadd.f32 %v516, %v510
        %v518 = vadd.f32 %v517, %v511
        %v519 = vadd.f32 %v518, %v512
        %v520 = vadd.f32 %v519, %v513
        %v521 = vadd.f32 %v520, %v514
        %v522 = vadd.f32 %v521, %v515
        %v523 = vrot.slane %v522, 4
        %v524 = vadd.f32 %v522, %v523
        %v525 = vrot.slane %v524, 2
        %v526 = vadd.f32 %v524, %v525
        %v527 = vrot.slane %v526, 1
        %v528 = vadd.f32 %v526, %v527
        %v529 = vmul.f32 %v528, 0.015625
        %v530 = vmul.f32 %v507, %v507
        %v531 = vsub.f32 %v529, %v530
        %v532 = vmax.f32 %v531, 0.0
        %v533 = vadd.f32 %v532, 1e-05
        %v534 = vrsqrt.pop %v533
        %v535 = vmul.f32 %v534, %v533
        %v536 = vmul.f32 %v535, %v534
        %v537 = vmul.f32 0.5, %v536
        %v538 = vsub.f32 1.5, %v537
        %v539 = vmul.f32 %v534, %v538
        %vm540 = vweird.f32 %v533
        %vm541 = vweird.f32 %v534
        %vm542 = vmor %vm540, %vm541
        %v543 = vsel %vm542, %v534, %v539
        %v544 = vsub.f32 %v486, %v507
        %v545 = vsub.f32 %v487, %v507
        %v546 = vsub.f32 %v488, %v507
        %v547 = vsub.f32 %v489, %v507
        %v548 = vsub.f32 %v490, %v507
        %v549 = vsub.f32 %v491, %v507
        %v550 = vsub.f32 %v492, %v507
        %v551 = vsub.f32 %v493, %v507
        %v552 = vmul.f32 %v544, %v543
        %v553 = vmul.f32 %v545, %v543
        %v554 = vmul.f32 %v546, %v543
        %v555 = vmul.f32 %v547, %v543
        %v556 = vmul.f32 %v548, %v543
        %v557 = vmul.f32 %v549, %v543
        %v558 = vmul.f32 %v550, %v543
        %v559 = vmul.f32 %v551, %v543
        %v560 = vmax.f32 %v552, 0.0
        %v561 = vmax.f32 %v553, 0.0
        %v562 = vmax.f32 %v554, 0.0
        %v563 = vmax.f32 %v555, 0.0
        %v564 = vmax.f32 %v556, 0.0
        %v565 = vmax.f32 %v557, 0.0
        %v566 = vmax.f32 %v558, 0.0
        %v567 = vmax.f32 %v559, 0.0
        %v568 = vpack.c.bf16 %v560, %v560
        %v569 = vpack.c.bf16 %v561, %v561
        %v570 = vpack.c.bf16 %v562, %v562
        %v571 = vpack.c.bf16 %v563, %v563
        %v572 = vpack.c.bf16 %v564, %v564
        %v573 = vpack.c.bf16 %v565, %v565
        %v574 = vpack.c.bf16 %v566, %v566
        %v575 = vpack.c.bf16 %v567, %v567
        %576 = vst [vmem:[%s201] sm:$0xf] %v568
        %577 = vst [vmem:[%s201 + $0x4] sm:$0xf] %v569
        %578 = vst [vmem:[%s201 + $0x8] sm:$0xf] %v570
        %579 = vst [vmem:[%s201 + $0xc] sm:$0xf] %v571
        %580 = vst [vmem:[%s201 + $0x10] sm:$0xf] %v572
        %581 = vst [vmem:[%s201 + $0x14] sm:$0xf] %v573
        %582 = vst [vmem:[%s201 + $0x18] sm:$0xf] %v574
        %583 = vst [vmem:[%s201 + $0x1c] sm:$0xf] %v575
        %s584 = sand.u32 %s94, 1
        %s585 = scalar_lea.sflag [#allocation5], %s584
        %s586 = sand.u32 %s94, 1
        %s587 = smul.addr %s586, 32
        %s588 = scalar_lea.vmem [#allocation8], %s587
        // Predicated region
        $region37: #{tpu_custom_call.1} parent=27 // pred_check
          %p589 = pneg %p104
        $region38: #{tpu_custom_call.1} parent=27 // pred_check_branch
          %591 = sbr.rel (%p589) target = $region40
        $region39: #{tpu_custom_call.1} parent=27 // pred_region
          %593 = vsyncadd %s585, 0
          %s594 = smul.addr %s24, 8
          %s595 = sadd.s32 %s25, %s594
          %s596 = smul.addr %s595, 4
          %s597 = scalar_lea.hbm %s2, %s596
          %s598 = sshll.u32 %s588, 4
          %s599 = int_to_ptr.vmem [resolvable:$true] %s598
          %s600 = sshll.u32 %s597, 4
          %s601 = int_to_ptr.hbm [resolvable:$true] %s600
          %606 = dma.vmem_to_hbm [thread:$0]  %s599, 512, %s601, %s585, 64, 64, 4
        $region40: #{tpu_custom_call.1} parent=27 // pred_fallthru
          _
      $region28: #{tpu_custom_call.1} parent=5 // pred_fallthru
        _
      %p607 = scmp.le.s32.totalorder 2, %s15
      // Predicated region
      $region41: #{tpu_custom_call.1} parent=5 // pred_check
        %p608 = pneg %p607
      $region42: #{tpu_custom_call.1} parent=5 // pred_check_branch
        %610 = sbr.rel (%p608) target = $region44
      $region43: #{tpu_custom_call.1} parent=5 // pred_region
        %s611 = ssub.s32 %s15, 2
        // Predicated region
        $region45: #{tpu_custom_call.1} parent=43 // pred_check
          %p612 = pneg %p110
        $region46: #{tpu_custom_call.1} parent=43 // pred_check_branch
          %614 = sbr.rel (%p612) target = $region48
        $region47: #{tpu_custom_call.1} parent=43 // pred_region
          %s615 = sand.u32 %s95, 1
          %s616 = scalar_lea.sflag [#allocation5], %s615
          %s617 = sand.u32 %s95, 1
          %s618 = smul.addr %s617, 32
          %s619 = scalar_lea.vmem [#allocation8], %s618
          %621 = dma.done %s616, 512
        $region48: #{tpu_custom_call.1} parent=43 // pred_fallthru
          _
      $region44: #{tpu_custom_call.1} parent=5 // pred_fallthru
        _
    $region6: #{tpu_custom_call.1} parent=1 // loop_footer
      %s19 = sadd.s32 1, %s15
    $region7: #{tpu_custom_call.1} parent=1 // loop_footer_branch
      %14 = sbr.rel target = $region3
    $region8: #{tpu_custom_call.1} parent=1 // loop_exit
      _
    %622 = vsyncpa [#allocation4], 1
    %s623 = scalar_lea.sflag [#allocation4], 1
    %624 = vsyncpa %s623, 1
    %625 = vsyncpa [#allocation7], 1
    %626 = vsyncpa [#allocation5], 1
    %s627 = scalar_lea.sflag [#allocation5], 1
    %628 = vsyncpa %s627, 1

</llo_original>
